<compile_context>
chip_gen: v7x
topology: tpu7x:2x2x1
jax: 0.10.0
libtpu: 0.0.40
codegen_flags: <defaults>
</compile_context>

<pallas_src>
import functools

import jax
import jax.numpy as jnp
from jax import lax
from jax.experimental import pallas as pl
from jax.experimental.pallas import tpu as pltpu


_MXU_MIN_K = 64  # below this, the 1x1 "conv" runs on the VPU instead of MXU


def _silu(x):
    return x * jax.nn.sigmoid(x)


def _conv1x1(w, x):
    """(Cout, Cin) @ (Cin, L) -> (Cout, L), f32 accumulation."""
    cout, cin = w.shape
    if cin >= _MXU_MIN_K and cout >= 8:
        return jnp.dot(w, x, preferred_element_type=jnp.float32)
    # Tiny channel counts: broadcast-FMA (outer-product accumulation) on VPU.
    wf = w.astype(jnp.float32)
    xf = x.astype(jnp.float32)
    acc = wf[:, 0:1] * xf[0:1, :]
    for c in range(1, cin):
        acc = acc + wf[:, c:c + 1] * xf[c:c + 1, :]
    return acc


def _maxpool5(x, w_masks, h_masks, W):
    """5x5 max pool, stride 1, pad 2 on (C, H*W) flattened layout.

    Shifts are lane rotations (pltpu.roll); wraparound across row / image
    boundaries is killed with the precomputed -inf masks (exact at borders).
    """
    L = x.shape[-1]
    neg_inf = jnp.float32(-jnp.inf)

    # --- W direction (shift by +-1, +-2 lanes within a row) ---
    out = x
    for d, (m_plus, m_minus) in zip((1, 2), w_masks):
        s = pltpu.roll(x, (L - d) % L, 1)          # s[p] = x[p + d]
        out = jnp.maximum(out, jnp.where(m_plus, s, neg_inf))
        s = pltpu.roll(x, d % L, 1)                # s[p] = x[p - d]
        out = jnp.maximum(out, jnp.where(m_minus, s, neg_inf))

    # --- H direction (shift by +-W, +-2W lanes) on the W-pooled result ---
    res = out
    for d, (m_plus, m_minus) in zip((1, 2), h_masks):
        s = pltpu.roll(out, (L - d * W) % L, 1)    # s[p] = x[p + d*W]
        res = jnp.maximum(res, jnp.where(m_plus, s, neg_inf))
        s = pltpu.roll(out, (d * W) % L, 1)        # s[p] = x[p - d*W]
        res = jnp.maximum(res, jnp.where(m_minus, s, neg_inf))
    return res


def sppf_kernel(x_ref, w1_ref, b1_ref, w2_ref, b2_ref, idx_ref, o_ref, *, H, W):
    # x_ref:  (bb, C1, H*W)   w1_ref: (c_, C1)      b1_ref: (c_, 1)
    # w2_ref: (4, c2, c_)     b2_ref: (c2, 1)       idx_ref: (2, H*W) int32
    # o_ref:  (bb, c2, H*W)
    bb = x_ref.shape[0]

    # Hoisted once per grid step: boundary masks for the separable pool.
    w_idx = idx_ref[0:1, :]                        # (1, L): lane % W
    h_idx = idx_ref[1:2, :]                        # (1, L): lane // W
    w_masks = tuple((w_idx < W - d, w_idx >= d) for d in (1, 2))
    h_masks = tuple((h_idx < H - d, h_idx >= d) for d in (1, 2))

    # Hoisted weight / bias loads (resident across the batch loop).
    w1 = w1_ref[...]
    b1 = b1_ref[...]
    b2 = b2_ref[...]
    w2s = [w2_ref[k] for k in range(4)]            # four (c2, c_) slices

    for bi in range(bb):
        xb = x_ref[bi]                             # (C1, L)

        # cv1: fused 1x1 conv + folded BN + SiLU
        y = _silu(_conv1x1(w1, xb) + b1)

        # three cascaded 5x5 stride-1 max pools
        y1 = _maxpool5(y, w_masks, h_masks, W)
        y2 = _maxpool5(y1, w_masks, h_masks, W)
        y3 = _maxpool5(y2, w_masks, h_masks, W)

        # cv2: accumulate four weight-slice products (no cat materialized)
        z = (_conv1x1(w2s[0], y) + _conv1x1(w2s[1], y1)
             + _conv1x1(w2s[2], y2) + _conv1x1(w2s[3], y3))
        z = _silu(z + b2)

        o_ref[bi] = z.astype(o_ref.dtype)          # lane-dense store (L lanes)


def sppf_pallas(x, w1f, b1f, w2f, b2f, *, batch_block=None):
    b, c1, h, w = x.shape
    hw = h * w
    c_hid = w1f.shape[0]
    c2 = w2f.shape[0]

    if batch_block is None:
        batch_block = b if b <= 8 else 1
    assert b % batch_block == 0, (b, batch_block)

    # Lane-dense flatten in the wrapper (free at the XLA level).
    x_flat = x.reshape(b, c1, hw)
    # Pre-split w2 into the 4 column blocks matching cat((y, y1, y2, y3)).
    w2_split = w2f.reshape(c2, 4, c_hid).transpose(1, 0, 2)    # (4, c2, c_)
    b1c = b1f.reshape(c_hid, 1)
    b2c = b2f.reshape(c2, 1)
    # Precomputed row/col indices for the pool boundary masks (no in-kernel
    # integer div/rem).
    lane = jnp.arange(hw, dtype=jnp.int32)
    pool_idx = jnp.stack([lane % w, lane // w], axis=0)        # (2, H*W)

    flops = 2 * (c_hid * c1 + c2 * 4 * c_hid) * b * hw
    transcendentals = (c_hid + c2) * b * hw
    bytes_accessed = 4 * (b * c1 * hw + b * c2 * hw
                          + c_hid * c1 + 4 * c2 * c_hid
                          + c_hid + c2 + 2 * hw)

    kern = functools.partial(sppf_kernel, H=h, W=w)

    out_flat = pl.pallas_call(
        kern,
        out_shape=jax.ShapeDtypeStruct((b, c2, hw), jnp.float32),
        grid=(b // batch_block,),
        in_specs=[
            pl.BlockSpec((batch_block, c1, hw), lambda i: (i, 0, 0)),
            pl.BlockSpec((c_hid, c1), lambda i: (0, 0)),
            pl.BlockSpec((c_hid, 1), lambda i: (0, 0)),
            pl.BlockSpec((4, c2, c_hid), lambda i: (0, 0, 0)),
            pl.BlockSpec((c2, 1), lambda i: (0, 0)),
            pl.BlockSpec((2, hw), lambda i: (0, 0)),
        ],
        out_specs=pl.BlockSpec((batch_block, c2, hw), lambda i: (i, 0, 0)),
        compiler_params=pltpu.CompilerParams(
            dimension_semantics=("parallel",)),
        cost_estimate=pl.CostEstimate(
            flops=flops,
            transcendentals=transcendentals,
            bytes_accessed=bytes_accessed),
    )(x_flat, w1f, b1c, w2_split, b2c, pool_idx)

    return out_flat.reshape(b, c2, h, w)


def fold_bn(w, gamma, beta, mean, var, eps=1e-3):
    """Fold BatchNorm into a bias-free 1x1 conv weight (c_out, c_in)."""
    scale = gamma / jnp.sqrt(var + eps)
    w_f = w * scale[:, None]
    b_f = beta - mean * scale
    return w_f, b_f


def sppf_reference(x, w1, bn1, w2, bn2, eps=1e-3):
    """Pure-JAX reference replicating the PyTorch SPPF forward (eval mode)."""
    def conv_bn_silu(z, w, bn):
        gamma, beta, mean, var = bn
        y = jnp.einsum('oc,bchw->bohw', w, z)
        y = gamma[None, :, None, None] * (y - mean[None, :, None, None]) \
            / jnp.sqrt(var[None, :, None, None] + eps) + beta[None, :, None, None]
        return y * jax.nn.sigmoid(y)

    def mp(z):
        return lax.reduce_window(z, -jnp.inf, lax.max,
                                 (1, 1, 5, 5), (1, 1, 1, 1),
                                 [(0, 0), (0, 0), (2, 2), (2, 2)])

    y = conv_bn_silu(x, w1, bn1)
    y1 = mp(y)
    y2 = mp(y1)
    y3 = mp(y2)
    cat = jnp.concatenate([y, y1, y2, y3], axis=1)
    return conv_bn_silu(cat, w2, bn2)


if __name__ == "__main__":
    B, C1, H, W = 2, 4, 16, 16
    C2 = 8
    C_ = C1 // 2  # hidden channels of cv1

    key = jax.random.PRNGKey(0)
    kx, kw1, kw2 = jax.random.split(key, 3)

    x = jax.random.normal(kx, (B, C1, H, W), dtype=jnp.float32)

    # cv1: Conv2d(C1, C_, 1, bias=False) + BN(C_) ; weights are (c_out, c_in)
    w1 = jax.random.normal(kw1, (C_, C1), dtype=jnp.float32) * 0.5
    bn1 = (1.0 + 0.1 * jnp.arange(C_, dtype=jnp.float32),    # gamma
           0.05 * jnp.arange(C_, dtype=jnp.float32),          # beta
           0.02 * jnp.arange(C_, dtype=jnp.float32),          # running_mean
           1.0 + 0.3 * jnp.arange(C_, dtype=jnp.float32))     # running_var

    # cv2: Conv2d(4*C_, C2, 1, bias=False) + BN(C2)
    w2 = jax.random.normal(kw2, (C2, 4 * C_), dtype=jnp.float32) * 0.3
    bn2 = (1.0 + 0.05 * jnp.arange(C2, dtype=jnp.float32),
           0.02 * jnp.arange(C2, dtype=jnp.float32),
           0.01 * jnp.arange(C2, dtype=jnp.float32),
           1.0 + 0.2 * jnp.arange(C2, dtype=jnp.float32))

    # Fold BN into the 1x1 conv weights for the fused Pallas kernel.
    w1f, b1f = fold_bn(w1, *bn1)
    w2f, b2f = fold_bn(w2, *bn2)

    out = sppf_pallas(x, w1f, b1f, w2f, b2f)
    out = jax.block_until_ready(out)

    ref = jax.block_until_ready(sppf_reference(x, w1, bn1, w2, bn2))

    assert out.shape == (B, C2, H, W), out.shape
    assert jnp.allclose(out, ref, rtol=1e-4, atol=1e-4), \
        f"max abs err {jnp.max(jnp.abs(out - ref))}"
    print("KERNEL_OK")
</pallas_src>

<mosaic_0001>
module attributes {stable_mosaic.version = 11 : i64} {
  func.func @sppf_kernel(%arg0: i32, %arg1: memref<2x4x256xf32, #tpu.memory_space<vmem>>, %arg2: memref<2x4xf32, #tpu.memory_space<vmem>>, %arg3: memref<2x1xf32, #tpu.memory_space<vmem>>, %arg4: memref<4x8x2xf32, #tpu.memory_space<vmem>>, %arg5: memref<8x1xf32, #tpu.memory_space<vmem>>, %arg6: memref<2x256xi32, #tpu.memory_space<vmem>>, %arg7: memref<2x8x256xf32, #tpu.memory_space<vmem>>) attributes {dimension_semantics = [#tpu.dimension_semantics<parallel>], iteration_bounds = array<i64: 1>, scalar_prefetch = 0 : i64, scratch_operands = 0 : i64, tpu.core_type = #tpu.core_type<tc>, window_params = [{transform_indices = @transform_0, window_bounds = array<i64: 2, 4, 256>}, {pipeline_mode = #tpu.pipeline_mode<synchronous>, transform_indices = @transform_1, window_bounds = array<i64: 2, 4>}, {pipeline_mode = #tpu.pipeline_mode<synchronous>, transform_indices = @transform_2, window_bounds = array<i64: 2, 1>}, {pipeline_mode = #tpu.pipeline_mode<synchronous>, transform_indices = @transform_3, window_bounds = array<i64: 4, 8, 2>}, {pipeline_mode = #tpu.pipeline_mode<synchronous>, transform_indices = @transform_4, window_bounds = array<i64: 8, 1>}, {pipeline_mode = #tpu.pipeline_mode<synchronous>, transform_indices = @transform_5, window_bounds = array<i64: 2, 256>}, {transform_indices = @transform_6, window_bounds = array<i64: 2, 8, 256>}]} {
    %c0 = arith.constant 0 : index
    %c0_0 = arith.constant 0 : index
    %0 = vector.load %arg6[%c0, %c0_0] : memref<2x256xi32, #tpu.memory_space<vmem>>, vector<1x256xi32>
    %c1 = arith.constant 1 : index
    %c0_1 = arith.constant 0 : index
    %1 = vector.load %arg6[%c1, %c0_1] : memref<2x256xi32, #tpu.memory_space<vmem>>, vector<1x256xi32>
    %c15_i32 = arith.constant 15 : i32
    %2 = vector.broadcast %c15_i32 : i32 to vector<1x256xi32>
    %3 = arith.cmpi slt, %0, %2 : vector<1x256xi32>
    %c1_i32 = arith.constant 1 : i32
    %4 = vector.broadcast %c1_i32 : i32 to vector<1x256xi32>
    %5 = arith.cmpi sge, %0, %4 : vector<1x256xi32>
    %c14_i32 = arith.constant 14 : i32
    %6 = vector.broadcast %c14_i32 : i32 to vector<1x256xi32>
    %7 = arith.cmpi slt, %0, %6 : vector<1x256xi32>
    %c2_i32 = arith.constant 2 : i32
    %8 = vector.broadcast %c2_i32 : i32 to vector<1x256xi32>
    %9 = arith.cmpi sge, %0, %8 : vector<1x256xi32>
    %c15_i32_2 = arith.constant 15 : i32
    %10 = vector.broadcast %c15_i32_2 : i32 to vector<1x256xi32>
    %11 = arith.cmpi slt, %1, %10 : vector<1x256xi32>
    %c1_i32_3 = arith.constant 1 : i32
    %12 = vector.broadcast %c1_i32_3 : i32 to vector<1x256xi32>
    %13 = arith.cmpi sge, %1, %12 : vector<1x256xi32>
    %c14_i32_4 = arith.constant 14 : i32
    %14 = vector.broadcast %c14_i32_4 : i32 to vector<1x256xi32>
    %15 = arith.cmpi slt, %1, %14 : vector<1x256xi32>
    %c2_i32_5 = arith.constant 2 : i32
    %16 = vector.broadcast %c2_i32_5 : i32 to vector<1x256xi32>
    %17 = arith.cmpi sge, %1, %16 : vector<1x256xi32>
    %c0_6 = arith.constant 0 : index
    %c0_7 = arith.constant 0 : index
    %18 = vector.load %arg2[%c0_6, %c0_7] : memref<2x4xf32, #tpu.memory_space<vmem>>, vector<2x4xf32>
    %c0_8 = arith.constant 0 : index
    %c0_9 = arith.constant 0 : index
    %19 = vector.load %arg3[%c0_8, %c0_9] : memref<2x1xf32, #tpu.memory_space<vmem>>, vector<2x1xf32>
    %c0_10 = arith.constant 0 : index
    %c0_11 = arith.constant 0 : index
    %20 = vector.load %arg5[%c0_10, %c0_11] : memref<8x1xf32, #tpu.memory_space<vmem>>, vector<8x1xf32>
    %c0_12 = arith.constant 0 : index
    %c0_13 = arith.constant 0 : index
    %c0_14 = arith.constant 0 : index
    %21 = vector.load %arg4[%c0_12, %c0_13, %c0_14] : memref<4x8x2xf32, #tpu.memory_space<vmem>>, vector<1x8x2xf32>
    %22 = vector.shape_cast %21 : vector<1x8x2xf32> to vector<8x2xf32>
    %c1_15 = arith.constant 1 : index
    %c0_16 = arith.constant 0 : index
    %c0_17 = arith.constant 0 : index
    %23 = vector.load %arg4[%c1_15, %c0_16, %c0_17] : memref<4x8x2xf32, #tpu.memory_space<vmem>>, vector<1x8x2xf32>
    %24 = vector.shape_cast %23 : vector<1x8x2xf32> to vector<8x2xf32>
    %c2 = arith.constant 2 : index
    %c0_18 = arith.constant 0 : index
    %c0_19 = arith.constant 0 : index
    %25 = vector.load %arg4[%c2, %c0_18, %c0_19] : memref<4x8x2xf32, #tpu.memory_space<vmem>>, vector<1x8x2xf32>
    %26 = vector.shape_cast %25 : vector<1x8x2xf32> to vector<8x2xf32>
    %c3 = arith.constant 3 : index
    %c0_20 = arith.constant 0 : index
    %c0_21 = arith.constant 0 : index
    %27 = vector.load %arg4[%c3, %c0_20, %c0_21] : memref<4x8x2xf32, #tpu.memory_space<vmem>>, vector<1x8x2xf32>
    %28 = vector.shape_cast %27 : vector<1x8x2xf32> to vector<8x2xf32>
    %c0_22 = arith.constant 0 : index
    %c0_23 = arith.constant 0 : index
    %c0_24 = arith.constant 0 : index
    %29 = vector.load %arg1[%c0_22, %c0_23, %c0_24] : memref<2x4x256xf32, #tpu.memory_space<vmem>>, vector<1x4x256xf32>
    %30 = vector.shape_cast %29 : vector<1x4x256xf32> to vector<4x256xf32>
    %31 = vector.extract_strided_slice %18 {offsets = [0, 0], sizes = [2, 1], strides = [1, 1]} : vector<2x4xf32> to vector<2x1xf32>
    %32 = vector.extract_strided_slice %30 {offsets = [0, 0], sizes = [1, 256], strides = [1, 1]} : vector<4x256xf32> to vector<1x256xf32>
    %33 = vector.broadcast %31 : vector<2x1xf32> to vector<2x256xf32>
    %34 = vector.broadcast %32 : vector<1x256xf32> to vector<2x256xf32>
    %35 = arith.mulf %33, %34 : vector<2x256xf32>
    %36 = vector.extract_strided_slice %18 {offsets = [0, 1], sizes = [2, 1], strides = [1, 1]} : vector<2x4xf32> to vector<2x1xf32>
    %37 = vector.extract_strided_slice %30 {offsets = [1, 0], sizes = [1, 256], strides = [1, 1]} : vector<4x256xf32> to vector<1x256xf32>
    %38 = vector.broadcast %36 : vector<2x1xf32> to vector<2x256xf32>
    %39 = vector.broadcast %37 : vector<1x256xf32> to vector<2x256xf32>
    %40 = arith.mulf %38, %39 : vector<2x256xf32>
    %41 = arith.addf %35, %40 : vector<2x256xf32>
    %42 = vector.extract_strided_slice %18 {offsets = [0, 2], sizes = [2, 1], strides = [1, 1]} : vector<2x4xf32> to vector<2x1xf32>
    %43 = vector.extract_strided_slice %30 {offsets = [2, 0], sizes = [1, 256], strides = [1, 1]} : vector<4x256xf32> to vector<1x256xf32>
    %44 = vector.broadcast %42 : vector<2x1xf32> to vector<2x256xf32>
    %45 = vector.broadcast %43 : vector<1x256xf32> to vector<2x256xf32>
    %46 = arith.mulf %44, %45 : vector<2x256xf32>
    %47 = arith.addf %41, %46 : vector<2x256xf32>
    %48 = vector.extract_strided_slice %18 {offsets = [0, 3], sizes = [2, 1], strides = [1, 1]} : vector<2x4xf32> to vector<2x1xf32>
    %49 = vector.extract_strided_slice %30 {offsets = [3, 0], sizes = [1, 256], strides = [1, 1]} : vector<4x256xf32> to vector<1x256xf32>
    %50 = vector.broadcast %48 : vector<2x1xf32> to vector<2x256xf32>
    %51 = vector.broadcast %49 : vector<1x256xf32> to vector<2x256xf32>
    %52 = arith.mulf %50, %51 : vector<2x256xf32>
    %53 = arith.addf %47, %52 : vector<2x256xf32>
    %54 = vector.broadcast %19 : vector<2x1xf32> to vector<2x256xf32>
    %55 = arith.addf %53, %54 : vector<2x256xf32>
    %56 = arith.negf %55 : vector<2x256xf32>
    %57 = math.exp %56 : vector<2x256xf32>
    %cst = arith.constant 1.000000e+00 : f32
    %58 = vector.broadcast %cst : f32 to vector<2x256xf32>
    %59 = arith.addf %58, %57 : vector<2x256xf32>
    %60 = arith.divf %58, %59 : vector<2x256xf32>
    %61 = arith.mulf %55, %60 : vector<2x256xf32>
    %c255_i32 = arith.constant 255 : i32
    %62 = tpu.dynamic_rotate %61 by %c255_i32 dim 1 : vector<2x256xf32>, i32 -> vector<2x256xf32>
    %cst_25 = arith.constant 0xFF800000 : f32
    %63 = vector.shape_cast %3 : vector<1x256xi1> to vector<1x256xi1>
    %64 = vector.broadcast %63 : vector<1x256xi1> to vector<2x256xi1>
    %65 = vector.broadcast %cst_25 : f32 to vector<2x256xf32>
    %66 = arith.select %64, %62, %65 : vector<2x256xi1>, vector<2x256xf32>
    %67 = arith.maximumf %61, %66 : vector<2x256xf32>
    %c1_i32_26 = arith.constant 1 : i32
    %68 = tpu.dynamic_rotate %61 by %c1_i32_26 dim 1 : vector<2x256xf32>, i32 -> vector<2x256xf32>
    %cst_27 = arith.constant 0xFF800000 : f32
    %69 = vector.shape_cast %5 : vector<1x256xi1> to vector<1x256xi1>
    %70 = vector.broadcast %69 : vector<1x256xi1> to vector<2x256xi1>
    %71 = vector.broadcast %cst_27 : f32 to vector<2x256xf32>
    %72 = arith.select %70, %68, %71 : vector<2x256xi1>, vector<2x256xf32>
    %73 = arith.maximumf %67, %72 : vector<2x256xf32>
    %c254_i32 = arith.constant 254 : i32
    %74 = tpu.dynamic_rotate %61 by %c254_i32 dim 1 : vector<2x256xf32>, i32 -> vector<2x256xf32>
    %cst_28 = arith.constant 0xFF800000 : f32
    %75 = vector.shape_cast %7 : vector<1x256xi1> to vector<1x256xi1>
    %76 = vector.broadcast %75 : vector<1x256xi1> to vector<2x256xi1>
    %77 = vector.broadcast %cst_28 : f32 to vector<2x256xf32>
    %78 = arith.select %76, %74, %77 : vector<2x256xi1>, vector<2x256xf32>
    %79 = arith.maximumf %73, %78 : vector<2x256xf32>
    %c2_i32_29 = arith.constant 2 : i32
    %80 = tpu.dynamic_rotate %61 by %c2_i32_29 dim 1 : vector<2x256xf32>, i32 -> vector<2x256xf32>
    %cst_30 = arith.constant 0xFF800000 : f32
    %81 = vector.shape_cast %9 : vector<1x256xi1> to vector<1x256xi1>
    %82 = vector.broadcast %81 : vector<1x256xi1> to vector<2x256xi1>
    %83 = vector.broadcast %cst_30 : f32 to vector<2x256xf32>
    %84 = arith.select %82, %80, %83 : vector<2x256xi1>, vector<2x256xf32>
    %85 = arith.maximumf %79, %84 : vector<2x256xf32>
    %c240_i32 = arith.constant 240 : i32
    %86 = tpu.dynamic_rotate %85 by %c240_i32 dim 1 : vector<2x256xf32>, i32 -> vector<2x256xf32>
    %cst_31 = arith.constant 0xFF800000 : f32
    %87 = vector.shape_cast %11 : vector<1x256xi1> to vector<1x256xi1>
    %88 = vector.broadcast %87 : vector<1x256xi1> to vector<2x256xi1>
    %89 = vector.broadcast %cst_31 : f32 to vector<2x256xf32>
    %90 = arith.select %88, %86, %89 : vector<2x256xi1>, vector<2x256xf32>
    %91 = arith.maximumf %85, %90 : vector<2x256xf32>
    %c16_i32 = arith.constant 16 : i32
    %92 = tpu.dynamic_rotate %85 by %c16_i32 dim 1 : vector<2x256xf32>, i32 -> vector<2x256xf32>
    %cst_32 = arith.constant 0xFF800000 : f32
    %93 = vector.shape_cast %13 : vector<1x256xi1> to vector<1x256xi1>
    %94 = vector.broadcast %93 : vector<1x256xi1> to vector<2x256xi1>
    %95 = vector.broadcast %cst_32 : f32 to vector<2x256xf32>
    %96 = arith.select %94, %92, %95 : vector<2x256xi1>, vector<2x256xf32>
    %97 = arith.maximumf %91, %96 : vector<2x256xf32>
    %c224_i32 = arith.constant 224 : i32
    %98 = tpu.dynamic_rotate %85 by %c224_i32 dim 1 : vector<2x256xf32>, i32 -> vector<2x256xf32>
    %cst_33 = arith.constant 0xFF800000 : f32
    %99 = vector.shape_cast %15 : vector<1x256xi1> to vector<1x256xi1>
    %100 = vector.broadcast %99 : vector<1x256xi1> to vector<2x256xi1>
    %101 = vector.broadcast %cst_33 : f32 to vector<2x256xf32>
    %102 = arith.select %100, %98, %101 : vector<2x256xi1>, vector<2x256xf32>
    %103 = arith.maximumf %97, %102 : vector<2x256xf32>
    %c32_i32 = arith.constant 32 : i32
    %104 = tpu.dynamic_rotate %85 by %c32_i32 dim 1 : vector<2x256xf32>, i32 -> vector<2x256xf32>
    %cst_34 = arith.constant 0xFF800000 : f32
    %105 = vector.shape_cast %17 : vector<1x256xi1> to vector<1x256xi1>
    %106 = vector.broadcast %105 : vector<1x256xi1> to vector<2x256xi1>
    %107 = vector.broadcast %cst_34 : f32 to vector<2x256xf32>
    %108 = arith.select %106, %104, %107 : vector<2x256xi1>, vector<2x256xf32>
    %109 = arith.maximumf %103, %108 : vector<2x256xf32>
    %c255_i32_35 = arith.constant 255 : i32
    %110 = tpu.dynamic_rotate %109 by %c255_i32_35 dim 1 : vector<2x256xf32>, i32 -> vector<2x256xf32>
    %cst_36 = arith.constant 0xFF800000 : f32
    %111 = vector.shape_cast %3 : vector<1x256xi1> to vector<1x256xi1>
    %112 = vector.broadcast %111 : vector<1x256xi1> to vector<2x256xi1>
    %113 = vector.broadcast %cst_36 : f32 to vector<2x256xf32>
    %114 = arith.select %112, %110, %113 : vector<2x256xi1>, vector<2x256xf32>
    %115 = arith.maximumf %109, %114 : vector<2x256xf32>
    %c1_i32_37 = arith.constant 1 : i32
    %116 = tpu.dynamic_rotate %109 by %c1_i32_37 dim 1 : vector<2x256xf32>, i32 -> vector<2x256xf32>
    %cst_38 = arith.constant 0xFF800000 : f32
    %117 = vector.shape_cast %5 : vector<1x256xi1> to vector<1x256xi1>
    %118 = vector.broadcast %117 : vector<1x256xi1> to vector<2x256xi1>
    %119 = vector.broadcast %cst_38 : f32 to vector<2x256xf32>
    %120 = arith.select %118, %116, %119 : vector<2x256xi1>, vector<2x256xf32>
    %121 = arith.maximumf %115, %120 : vector<2x256xf32>
    %c254_i32_39 = arith.constant 254 : i32
    %122 = tpu.dynamic_rotate %109 by %c254_i32_39 dim 1 : vector<2x256xf32>, i32 -> vector<2x256xf32>
    %cst_40 = arith.constant 0xFF800000 : f32
    %123 = vector.shape_cast %7 : vector<1x256xi1> to vector<1x256xi1>
    %124 = vector.broadcast %123 : vector<1x256xi1> to vector<2x256xi1>
    %125 = vector.broadcast %cst_40 : f32 to vector<2x256xf32>
    %126 = arith.select %124, %122, %125 : vector<2x256xi1>, vector<2x256xf32>
    %127 = arith.maximumf %121, %126 : vector<2x256xf32>
    %c2_i32_41 = arith.constant 2 : i32
    %128 = tpu.dynamic_rotate %109 by %c2_i32_41 dim 1 : vector<2x256xf32>, i32 -> vector<2x256xf32>
    %cst_42 = arith.constant 0xFF800000 : f32
    %129 = vector.shape_cast %9 : vector<1x256xi1> to vector<1x256xi1>
    %130 = vector.broadcast %129 : vector<1x256xi1> to vector<2x256xi1>
    %131 = vector.broadcast %cst_42 : f32 to vector<2x256xf32>
    %132 = arith.select %130, %128, %131 : vector<2x256xi1>, vector<2x256xf32>
    %133 = arith.maximumf %127, %132 : vector<2x256xf32>
    %c240_i32_43 = arith.constant 240 : i32
    %134 = tpu.dynamic_rotate %133 by %c240_i32_43 dim 1 : vector<2x256xf32>, i32 -> vector<2x256xf32>
    %cst_44 = arith.constant 0xFF800000 : f32
    %135 = vector.shape_cast %11 : vector<1x256xi1> to vector<1x256xi1>
    %136 = vector.broadcast %135 : vector<1x256xi1> to vector<2x256xi1>
    %137 = vector.broadcast %cst_44 : f32 to vector<2x256xf32>
    %138 = arith.select %136, %134, %137 : vector<2x256xi1>, vector<2x256xf32>
    %139 = arith.maximumf %133, %138 : vector<2x256xf32>
    %c16_i32_45 = arith.constant 16 : i32
    %140 = tpu.dynamic_rotate %133 by %c16_i32_45 dim 1 : vector<2x256xf32>, i32 -> vector<2x256xf32>
    %cst_46 = arith.constant 0xFF800000 : f32
    %141 = vector.shape_cast %13 : vector<1x256xi1> to vector<1x256xi1>
    %142 = vector.broadcast %141 : vector<1x256xi1> to vector<2x256xi1>
    %143 = vector.broadcast %cst_46 : f32 to vector<2x256xf32>
    %144 = arith.select %142, %140, %143 : vector<2x256xi1>, vector<2x256xf32>
    %145 = arith.maximumf %139, %144 : vector<2x256xf32>
    %c224_i32_47 = arith.constant 224 : i32
    %146 = tpu.dynamic_rotate %133 by %c224_i32_47 dim 1 : vector<2x256xf32>, i32 -> vector<2x256xf32>
    %cst_48 = arith.constant 0xFF800000 : f32
    %147 = vector.shape_cast %15 : vector<1x256xi1> to vector<1x256xi1>
    %148 = vector.broadcast %147 : vector<1x256xi1> to vector<2x256xi1>
    %149 = vector.broadcast %cst_48 : f32 to vector<2x256xf32>
    %150 = arith.select %148, %146, %149 : vector<2x256xi1>, vector<2x256xf32>
    %151 = arith.maximumf %145, %150 : vector<2x256xf32>
    %c32_i32_49 = arith.constant 32 : i32
    %152 = tpu.dynamic_rotate %133 by %c32_i32_49 dim 1 : vector<2x256xf32>, i32 -> vector<2x256xf32>
    %cst_50 = arith.constant 0xFF800000 : f32
    %153 = vector.shape_cast %17 : vector<1x256xi1> to vector<1x256xi1>
    %154 = vector.broadcast %153 : vector<1x256xi1> to vector<2x256xi1>
    %155 = vector.broadcast %cst_50 : f32 to vector<2x256xf32>
    %156 = arith.select %154, %152, %155 : vector<2x256xi1>, vector<2x256xf32>
    %157 = arith.maximumf %151, %156 : vector<2x256xf32>
    %c255_i32_51 = arith.constant 255 : i32
    %158 = tpu.dynamic_rotate %157 by %c255_i32_51 dim 1 : vector<2x256xf32>, i32 -> vector<2x256xf32>
    %cst_52 = arith.constant 0xFF800000 : f32
    %159 = vector.shape_cast %3 : vector<1x256xi1> to vector<1x256xi1>
    %160 = vector.broadcast %159 : vector<1x256xi1> to vector<2x256xi1>
    %161 = vector.broadcast %cst_52 : f32 to vector<2x256xf32>
    %162 = arith.select %160, %158, %161 : vector<2x256xi1>, vector<2x256xf32>
    %163 = arith.maximumf %157, %162 : vector<2x256xf32>
    %c1_i32_53 = arith.constant 1 : i32
    %164 = tpu.dynamic_rotate %157 by %c1_i32_53 dim 1 : vector<2x256xf32>, i32 -> vector<2x256xf32>
    %cst_54 = arith.constant 0xFF800000 : f32
    %165 = vector.shape_cast %5 : vector<1x256xi1> to vector<1x256xi1>
    %166 = vector.broadcast %165 : vector<1x256xi1> to vector<2x256xi1>
    %167 = vector.broadcast %cst_54 : f32 to vector<2x256xf32>
    %168 = arith.select %166, %164, %167 : vector<2x256xi1>, vector<2x256xf32>
    %169 = arith.maximumf %163, %168 : vector<2x256xf32>
    %c254_i32_55 = arith.constant 254 : i32
    %170 = tpu.dynamic_rotate %157 by %c254_i32_55 dim 1 : vector<2x256xf32>, i32 -> vector<2x256xf32>
    %cst_56 = arith.constant 0xFF800000 : f32
    %171 = vector.shape_cast %7 : vector<1x256xi1> to vector<1x256xi1>
    %172 = vector.broadcast %171 : vector<1x256xi1> to vector<2x256xi1>
    %173 = vector.broadcast %cst_56 : f32 to vector<2x256xf32>
    %174 = arith.select %172, %170, %173 : vector<2x256xi1>, vector<2x256xf32>
    %175 = arith.maximumf %169, %174 : vector<2x256xf32>
    %c2_i32_57 = arith.constant 2 : i32
    %176 = tpu.dynamic_rotate %157 by %c2_i32_57 dim 1 : vector<2x256xf32>, i32 -> vector<2x256xf32>
    %cst_58 = arith.constant 0xFF800000 : f32
    %177 = vector.shape_cast %9 : vector<1x256xi1> to vector<1x256xi1>
    %178 = vector.broadcast %177 : vector<1x256xi1> to vector<2x256xi1>
    %179 = vector.broadcast %cst_58 : f32 to vector<2x256xf32>
    %180 = arith.select %178, %176, %179 : vector<2x256xi1>, vector<2x256xf32>
    %181 = arith.maximumf %175, %180 : vector<2x256xf32>
    %c240_i32_59 = arith.constant 240 : i32
    %182 = tpu.dynamic_rotate %181 by %c240_i32_59 dim 1 : vector<2x256xf32>, i32 -> vector<2x256xf32>
    %cst_60 = arith.constant 0xFF800000 : f32
    %183 = vector.shape_cast %11 : vector<1x256xi1> to vector<1x256xi1>
    %184 = vector.broadcast %183 : vector<1x256xi1> to vector<2x256xi1>
    %185 = vector.broadcast %cst_60 : f32 to vector<2x256xf32>
    %186 = arith.select %184, %182, %185 : vector<2x256xi1>, vector<2x256xf32>
    %187 = arith.maximumf %181, %186 : vector<2x256xf32>
    %c16_i32_61 = arith.constant 16 : i32
    %188 = tpu.dynamic_rotate %181 by %c16_i32_61 dim 1 : vector<2x256xf32>, i32 -> vector<2x256xf32>
    %cst_62 = arith.constant 0xFF800000 : f32
    %189 = vector.shape_cast %13 : vector<1x256xi1> to vector<1x256xi1>
    %190 = vector.broadcast %189 : vector<1x256xi1> to vector<2x256xi1>
    %191 = vector.broadcast %cst_62 : f32 to vector<2x256xf32>
    %192 = arith.select %190, %188, %191 : vector<2x256xi1>, vector<2x256xf32>
    %193 = arith.maximumf %187, %192 : vector<2x256xf32>
    %c224_i32_63 = arith.constant 224 : i32
    %194 = tpu.dynamic_rotate %181 by %c224_i32_63 dim 1 : vector<2x256xf32>, i32 -> vector<2x256xf32>
    %cst_64 = arith.constant 0xFF800000 : f32
    %195 = vector.shape_cast %15 : vector<1x256xi1> to vector<1x256xi1>
    %196 = vector.broadcast %195 : vector<1x256xi1> to vector<2x256xi1>
    %197 = vector.broadcast %cst_64 : f32 to vector<2x256xf32>
    %198 = arith.select %196, %194, %197 : vector<2x256xi1>, vector<2x256xf32>
    %199 = arith.maximumf %193, %198 : vector<2x256xf32>
    %c32_i32_65 = arith.constant 32 : i32
    %200 = tpu.dynamic_rotate %181 by %c32_i32_65 dim 1 : vector<2x256xf32>, i32 -> vector<2x256xf32>
    %cst_66 = arith.constant 0xFF800000 : f32
    %201 = vector.shape_cast %17 : vector<1x256xi1> to vector<1x256xi1>
    %202 = vector.broadcast %201 : vector<1x256xi1> to vector<2x256xi1>
    %203 = vector.broadcast %cst_66 : f32 to vector<2x256xf32>
    %204 = arith.select %202, %200, %203 : vector<2x256xi1>, vector<2x256xf32>
    %205 = arith.maximumf %199, %204 : vector<2x256xf32>
    %206 = vector.extract_strided_slice %22 {offsets = [0, 0], sizes = [8, 1], strides = [1, 1]} : vector<8x2xf32> to vector<8x1xf32>
    %207 = vector.extract_strided_slice %61 {offsets = [0, 0], sizes = [1, 256], strides = [1, 1]} : vector<2x256xf32> to vector<1x256xf32>
    %208 = vector.broadcast %206 : vector<8x1xf32> to vector<8x256xf32>
    %209 = vector.broadcast %207 : vector<1x256xf32> to vector<8x256xf32>
    %210 = arith.mulf %208, %209 : vector<8x256xf32>
    %211 = vector.extract_strided_slice %22 {offsets = [0, 1], sizes = [8, 1], strides = [1, 1]} : vector<8x2xf32> to vector<8x1xf32>
    %212 = vector.extract_strided_slice %61 {offsets = [1, 0], sizes = [1, 256], strides = [1, 1]} : vector<2x256xf32> to vector<1x256xf32>
    %213 = vector.broadcast %211 : vector<8x1xf32> to vector<8x256xf32>
    %214 = vector.broadcast %212 : vector<1x256xf32> to vector<8x256xf32>
    %215 = arith.mulf %213, %214 : vector<8x256xf32>
    %216 = arith.addf %210, %215 : vector<8x256xf32>
    %217 = vector.extract_strided_slice %24 {offsets = [0, 0], sizes = [8, 1], strides = [1, 1]} : vector<8x2xf32> to vector<8x1xf32>
    %218 = vector.extract_strided_slice %109 {offsets = [0, 0], sizes = [1, 256], strides = [1, 1]} : vector<2x256xf32> to vector<1x256xf32>
    %219 = vector.broadcast %217 : vector<8x1xf32> to vector<8x256xf32>
    %220 = vector.broadcast %218 : vector<1x256xf32> to vector<8x256xf32>
    %221 = arith.mulf %219, %220 : vector<8x256xf32>
    %222 = vector.extract_strided_slice %24 {offsets = [0, 1], sizes = [8, 1], strides = [1, 1]} : vector<8x2xf32> to vector<8x1xf32>
    %223 = vector.extract_strided_slice %109 {offsets = [1, 0], sizes = [1, 256], strides = [1, 1]} : vector<2x256xf32> to vector<1x256xf32>
    %224 = vector.broadcast %222 : vector<8x1xf32> to vector<8x256xf32>
    %225 = vector.broadcast %223 : vector<1x256xf32> to vector<8x256xf32>
    %226 = arith.mulf %224, %225 : vector<8x256xf32>
    %227 = arith.addf %221, %226 : vector<8x256xf32>
    %228 = arith.addf %216, %227 : vector<8x256xf32>
    %229 = vector.extract_strided_slice %26 {offsets = [0, 0], sizes = [8, 1], strides = [1, 1]} : vector<8x2xf32> to vector<8x1xf32>
    %230 = vector.extract_strided_slice %157 {offsets = [0, 0], sizes = [1, 256], strides = [1, 1]} : vector<2x256xf32> to vector<1x256xf32>
    %231 = vector.broadcast %229 : vector<8x1xf32> to vector<8x256xf32>
    %232 = vector.broadcast %230 : vector<1x256xf32> to vector<8x256xf32>
    %233 = arith.mulf %231, %232 : vector<8x256xf32>
    %234 = vector.extract_strided_slice %26 {offsets = [0, 1], sizes = [8, 1], strides = [1, 1]} : vector<8x2xf32> to vector<8x1xf32>
    %235 = vector.extract_strided_slice %157 {offsets = [1, 0], sizes = [1, 256], strides = [1, 1]} : vector<2x256xf32> to vector<1x256xf32>
    %236 = vector.broadcast %234 : vector<8x1xf32> to vector<8x256xf32>
    %237 = vector.broadcast %235 : vector<1x256xf32> to vector<8x256xf32>
    %238 = arith.mulf %236, %237 : vector<8x256xf32>
    %239 = arith.addf %233, %238 : vector<8x256xf32>
    %240 = arith.addf %228, %239 : vector<8x256xf32>
    %241 = vector.extract_strided_slice %28 {offsets = [0, 0], sizes = [8, 1], strides = [1, 1]} : vector<8x2xf32> to vector<8x1xf32>
    %242 = vector.extract_strided_slice %205 {offsets = [0, 0], sizes = [1, 256], strides = [1, 1]} : vector<2x256xf32> to vector<1x256xf32>
    %243 = vector.broadcast %241 : vector<8x1xf32> to vector<8x256xf32>
    %244 = vector.broadcast %242 : vector<1x256xf32> to vector<8x256xf32>
    %245 = arith.mulf %243, %244 : vector<8x256xf32>
    %246 = vector.extract_strided_slice %28 {offsets = [0, 1], sizes = [8, 1], strides = [1, 1]} : vector<8x2xf32> to vector<8x1xf32>
    %247 = vector.extract_strided_slice %205 {offsets = [1, 0], sizes = [1, 256], strides = [1, 1]} : vector<2x256xf32> to vector<1x256xf32>
    %248 = vector.broadcast %246 : vector<8x1xf32> to vector<8x256xf32>
    %249 = vector.broadcast %247 : vector<1x256xf32> to vector<8x256xf32>
    %250 = arith.mulf %248, %249 : vector<8x256xf32>
    %251 = arith.addf %245, %250 : vector<8x256xf32>
    %252 = arith.addf %240, %251 : vector<8x256xf32>
    %253 = vector.broadcast %20 : vector<8x1xf32> to vector<8x256xf32>
    %254 = arith.addf %252, %253 : vector<8x256xf32>
    %255 = arith.negf %254 : vector<8x256xf32>
    %256 = math.exp %255 : vector<8x256xf32>
    %cst_67 = arith.constant 1.000000e+00 : f32
    %257 = vector.broadcast %cst_67 : f32 to vector<8x256xf32>
    %258 = arith.addf %257, %256 : vector<8x256xf32>
    %259 = arith.divf %257, %258 : vector<8x256xf32>
    %260 = arith.mulf %254, %259 : vector<8x256xf32>
    %c0_68 = arith.constant 0 : index
    %c0_69 = arith.constant 0 : index
    %c0_70 = arith.constant 0 : index
    %261 = vector.load %arg7[%c0_68, %c0_69, %c0_70] : memref<2x8x256xf32, #tpu.memory_space<vmem>>, vector<1x8x256xf32>
    %262 = vector.shape_cast %261 : vector<1x8x256xf32> to vector<8x256xf32>
    %263 = vector.shape_cast %260 : vector<8x256xf32> to vector<1x8x256xf32>
    tpu.vector_store %arg7[%c0_68, %c0_69, %c0_70], %263 {strides = array<i32>} : memref<2x8x256xf32, #tpu.memory_space<vmem>>, vector<1x8x256xf32>,
    %c1_71 = arith.constant 1 : index
    %c0_72 = arith.constant 0 : index
    %c0_73 = arith.constant 0 : index
    %264 = vector.load %arg1[%c1_71, %c0_72, %c0_73] : memref<2x4x256xf32, #tpu.memory_space<vmem>>, vector<1x4x256xf32>
    %265 = vector.shape_cast %264 : vector<1x4x256xf32> to vector<4x256xf32>
    %266 = vector.extract_strided_slice %18 {offsets = [0, 0], sizes = [2, 1], strides = [1, 1]} : vector<2x4xf32> to vector<2x1xf32>
    %267 = vector.extract_strided_slice %265 {offsets = [0, 0], sizes = [1, 256], strides = [1, 1]} : vector<4x256xf32> to vector<1x256xf32>
    %268 = vector.broadcast %266 : vector<2x1xf32> to vector<2x256xf32>
    %269 = vector.broadcast %267 : vector<1x256xf32> to vector<2x256xf32>
    %270 = arith.mulf %268, %269 : vector<2x256xf32>
    %271 = vector.extract_strided_slice %18 {offsets = [0, 1], sizes = [2, 1], strides = [1, 1]} : vector<2x4xf32> to vector<2x1xf32>
    %272 = vector.extract_strided_slice %265 {offsets = [1, 0], sizes = [1, 256], strides = [1, 1]} : vector<4x256xf32> to vector<1x256xf32>
    %273 = vector.broadcast %271 : vector<2x1xf32> to vector<2x256xf32>
    %274 = vector.broadcast %272 : vector<1x256xf32> to vector<2x256xf32>
    %275 = arith.mulf %273, %274 : vector<2x256xf32>
    %276 = arith.addf %270, %275 : vector<2x256xf32>
    %277 = vector.extract_strided_slice %18 {offsets = [0, 2], sizes = [2, 1], strides = [1, 1]} : vector<2x4xf32> to vector<2x1xf32>
    %278 = vector.extract_strided_slice %265 {offsets = [2, 0], sizes = [1, 256], strides = [1, 1]} : vector<4x256xf32> to vector<1x256xf32>
    %279 = vector.broadcast %277 : vector<2x1xf32> to vector<2x256xf32>
    %280 = vector.broadcast %278 : vector<1x256xf32> to vector<2x256xf32>
    %281 = arith.mulf %279, %280 : vector<2x256xf32>
    %282 = arith.addf %276, %281 : vector<2x256xf32>
    %283 = vector.extract_strided_slice %18 {offsets = [0, 3], sizes = [2, 1], strides = [1, 1]} : vector<2x4xf32> to vector<2x1xf32>
    %284 = vector.extract_strided_slice %265 {offsets = [3, 0], sizes = [1, 256], strides = [1, 1]} : vector<4x256xf32> to vector<1x256xf32>
    %285 = vector.broadcast %283 : vector<2x1xf32> to vector<2x256xf32>
    %286 = vector.broadcast %284 : vector<1x256xf32> to vector<2x256xf32>
    %287 = arith.mulf %285, %286 : vector<2x256xf32>
    %288 = arith.addf %282, %287 : vector<2x256xf32>
    %289 = vector.broadcast %19 : vector<2x1xf32> to vector<2x256xf32>
    %290 = arith.addf %288, %289 : vector<2x256xf32>
    %291 = arith.negf %290 : vector<2x256xf32>
    %292 = math.exp %291 : vector<2x256xf32>
    %cst_74 = arith.constant 1.000000e+00 : f32
    %293 = vector.broadcast %cst_74 : f32 to vector<2x256xf32>
    %294 = arith.addf %293, %292 : vector<2x256xf32>
    %295 = arith.divf %293, %294 : vector<2x256xf32>
    %296 = arith.mulf %290, %295 : vector<2x256xf32>
    %c255_i32_75 = arith.constant 255 : i32
    %297 = tpu.dynamic_rotate %296 by %c255_i32_75 dim 1 : vector<2x256xf32>, i32 -> vector<2x256xf32>
    %cst_76 = arith.constant 0xFF800000 : f32
    %298 = vector.shape_cast %3 : vector<1x256xi1> to vector<1x256xi1>
    %299 = vector.broadcast %298 : vector<1x256xi1> to vector<2x256xi1>
    %300 = vector.broadcast %cst_76 : f32 to vector<2x256xf32>
    %301 = arith.select %299, %297, %300 : vector<2x256xi1>, vector<2x256xf32>
    %302 = arith.maximumf %296, %301 : vector<2x256xf32>
    %c1_i32_77 = arith.constant 1 : i32
    %303 = tpu.dynamic_rotate %296 by %c1_i32_77 dim 1 : vector<2x256xf32>, i32 -> vector<2x256xf32>
    %cst_78 = arith.constant 0xFF800000 : f32
    %304 = vector.shape_cast %5 : vector<1x256xi1> to vector<1x256xi1>
    %305 = vector.broadcast %304 : vector<1x256xi1> to vector<2x256xi1>
    %306 = vector.broadcast %cst_78 : f32 to vector<2x256xf32>
    %307 = arith.select %305, %303, %306 : vector<2x256xi1>, vector<2x256xf32>
    %308 = arith.maximumf %302, %307 : vector<2x256xf32>
    %c254_i32_79 = arith.constant 254 : i32
    %309 = tpu.dynamic_rotate %296 by %c254_i32_79 dim 1 : vector<2x256xf32>, i32 -> vector<2x256xf32>
    %cst_80 = arith.constant 0xFF800000 : f32
    %310 = vector.shape_cast %7 : vector<1x256xi1> to vector<1x256xi1>
    %311 = vector.broadcast %310 : vector<1x256xi1> to vector<2x256xi1>
    %312 = vector.broadcast %cst_80 : f32 to vector<2x256xf32>
    %313 = arith.select %311, %309, %312 : vector<2x256xi1>, vector<2x256xf32>
    %314 = arith.maximumf %308, %313 : vector<2x256xf32>
    %c2_i32_81 = arith.constant 2 : i32
    %315 = tpu.dynamic_rotate %296 by %c2_i32_81 dim 1 : vector<2x256xf32>, i32 -> vector<2x256xf32>
    %cst_82 = arith.constant 0xFF800000 : f32
    %316 = vector.shape_cast %9 : vector<1x256xi1> to vector<1x256xi1>
    %317 = vector.broadcast %316 : vector<1x256xi1> to vector<2x256xi1>
    %318 = vector.broadcast %cst_82 : f32 to vector<2x256xf32>
    %319 = arith.select %317, %315, %318 : vector<2x256xi1>, vector<2x256xf32>
    %320 = arith.maximumf %314, %319 : vector<2x256xf32>
    %c240_i32_83 = arith.constant 240 : i32
    %321 = tpu.dynamic_rotate %320 by %c240_i32_83 dim 1 : vector<2x256xf32>, i32 -> vector<2x256xf32>
    %cst_84 = arith.constant 0xFF800000 : f32
    %322 = vector.shape_cast %11 : vector<1x256xi1> to vector<1x256xi1>
    %323 = vector.broadcast %322 : vector<1x256xi1> to vector<2x256xi1>
    %324 = vector.broadcast %cst_84 : f32 to vector<2x256xf32>
    %325 = arith.select %323, %321, %324 : vector<2x256xi1>, vector<2x256xf32>
    %326 = arith.maximumf %320, %325 : vector<2x256xf32>
    %c16_i32_85 = arith.constant 16 : i32
    %327 = tpu.dynamic_rotate %320 by %c16_i32_85 dim 1 : vector<2x256xf32>, i32 -> vector<2x256xf32>
    %cst_86 = arith.constant 0xFF800000 : f32
    %328 = vector.shape_cast %13 : vector<1x256xi1> to vector<1x256xi1>
    %329 = vector.broadcast %328 : vector<1x256xi1> to vector<2x256xi1>
    %330 = vector.broadcast %cst_86 : f32 to vector<2x256xf32>
    %331 = arith.select %329, %327, %330 : vector<2x256xi1>, vector<2x256xf32>
    %332 = arith.maximumf %326, %331 : vector<2x256xf32>
    %c224_i32_87 = arith.constant 224 : i32
    %333 = tpu.dynamic_rotate %320 by %c224_i32_87 dim 1 : vector<2x256xf32>, i32 -> vector<2x256xf32>
    %cst_88 = arith.constant 0xFF800000 : f32
    %334 = vector.shape_cast %15 : vector<1x256xi1> to vector<1x256xi1>
    %335 = vector.broadcast %334 : vector<1x256xi1> to vector<2x256xi1>
    %336 = vector.broadcast %cst_88 : f32 to vector<2x256xf32>
    %337 = arith.select %335, %333, %336 : vector<2x256xi1>, vector<2x256xf32>
    %338 = arith.maximumf %332, %337 : vector<2x256xf32>
    %c32_i32_89 = arith.constant 32 : i32
    %339 = tpu.dynamic_rotate %320 by %c32_i32_89 dim 1 : vector<2x256xf32>, i32 -> vector<2x256xf32>
    %cst_90 = arith.constant 0xFF800000 : f32
    %340 = vector.shape_cast %17 : vector<1x256xi1> to vector<1x256xi1>
    %341 = vector.broadcast %340 : vector<1x256xi1> to vector<2x256xi1>
    %342 = vector.broadcast %cst_90 : f32 to vector<2x256xf32>
    %343 = arith.select %341, %339, %342 : vector<2x256xi1>, vector<2x256xf32>
    %344 = arith.maximumf %338, %343 : vector<2x256xf32>
    %c255_i32_91 = arith.constant 255 : i32
    %345 = tpu.dynamic_rotate %344 by %c255_i32_91 dim 1 : vector<2x256xf32>, i32 -> vector<2x256xf32>
    %cst_92 = arith.constant 0xFF800000 : f32
    %346 = vector.shape_cast %3 : vector<1x256xi1> to vector<1x256xi1>
    %347 = vector.broadcast %346 : vector<1x256xi1> to vector<2x256xi1>
    %348 = vector.broadcast %cst_92 : f32 to vector<2x256xf32>
    %349 = arith.select %347, %345, %348 : vector<2x256xi1>, vector<2x256xf32>
    %350 = arith.maximumf %344, %349 : vector<2x256xf32>
    %c1_i32_93 = arith.constant 1 : i32
    %351 = tpu.dynamic_rotate %344 by %c1_i32_93 dim 1 : vector<2x256xf32>, i32 -> vector<2x256xf32>
    %cst_94 = arith.constant 0xFF800000 : f32
    %352 = vector.shape_cast %5 : vector<1x256xi1> to vector<1x256xi1>
    %353 = vector.broadcast %352 : vector<1x256xi1> to vector<2x256xi1>
    %354 = vector.broadcast %cst_94 : f32 to vector<2x256xf32>
    %355 = arith.select %353, %351, %354 : vector<2x256xi1>, vector<2x256xf32>
    %356 = arith.maximumf %350, %355 : vector<2x256xf32>
    %c254_i32_95 = arith.constant 254 : i32
    %357 = tpu.dynamic_rotate %344 by %c254_i32_95 dim 1 : vector<2x256xf32>, i32 -> vector<2x256xf32>
    %cst_96 = arith.constant 0xFF800000 : f32
    %358 = vector.shape_cast %7 : vector<1x256xi1> to vector<1x256xi1>
    %359 = vector.broadcast %358 : vector<1x256xi1> to vector<2x256xi1>
    %360 = vector.broadcast %cst_96 : f32 to vector<2x256xf32>
    %361 = arith.select %359, %357, %360 : vector<2x256xi1>, vector<2x256xf32>
    %362 = arith.maximumf %356, %361 : vector<2x256xf32>
    %c2_i32_97 = arith.constant 2 : i32
    %363 = tpu.dynamic_rotate %344 by %c2_i32_97 dim 1 : vector<2x256xf32>, i32 -> vector<2x256xf32>
    %cst_98 = arith.constant 0xFF800000 : f32
    %364 = vector.shape_cast %9 : vector<1x256xi1> to vector<1x256xi1>
    %365 = vector.broadcast %364 : vector<1x256xi1> to vector<2x256xi1>
    %366 = vector.broadcast %cst_98 : f32 to vector<2x256xf32>
    %367 = arith.select %365, %363, %366 : vector<2x256xi1>, vector<2x256xf32>
    %368 = arith.maximumf %362, %367 : vector<2x256xf32>
    %c240_i32_99 = arith.constant 240 : i32
    %369 = tpu.dynamic_rotate %368 by %c240_i32_99 dim 1 : vector<2x256xf32>, i32 -> vector<2x256xf32>
    %cst_100 = arith.constant 0xFF800000 : f32
    %370 = vector.shape_cast %11 : vector<1x256xi1> to vector<1x256xi1>
    %371 = vector.broadcast %370 : vector<1x256xi1> to vector<2x256xi1>
    %372 = vector.broadcast %cst_100 : f32 to vector<2x256xf32>
    %373 = arith.select %371, %369, %372 : vector<2x256xi1>, vector<2x256xf32>
    %374 = arith.maximumf %368, %373 : vector<2x256xf32>
    %c16_i32_101 = arith.constant 16 : i32
    %375 = tpu.dynamic_rotate %368 by %c16_i32_101 dim 1 : vector<2x256xf32>, i32 -> vector<2x256xf32>
    %cst_102 = arith.constant 0xFF800000 : f32
    %376 = vector.shape_cast %13 : vector<1x256xi1> to vector<1x256xi1>
    %377 = vector.broadcast %376 : vector<1x256xi1> to vector<2x256xi1>
    %378 = vector.broadcast %cst_102 : f32 to vector<2x256xf32>
    %379 = arith.select %377, %375, %378 : vector<2x256xi1>, vector<2x256xf32>
    %380 = arith.maximumf %374, %379 : vector<2x256xf32>
    %c224_i32_103 = arith.constant 224 : i32
    %381 = tpu.dynamic_rotate %368 by %c224_i32_103 dim 1 : vector<2x256xf32>, i32 -> vector<2x256xf32>
    %cst_104 = arith.constant 0xFF800000 : f32
    %382 = vector.shape_cast %15 : vector<1x256xi1> to vector<1x256xi1>
    %383 = vector.broadcast %382 : vector<1x256xi1> to vector<2x256xi1>
    %384 = vector.broadcast %cst_104 : f32 to vector<2x256xf32>
    %385 = arith.select %383, %381, %384 : vector<2x256xi1>, vector<2x256xf32>
    %386 = arith.maximumf %380, %385 : vector<2x256xf32>
    %c32_i32_105 = arith.constant 32 : i32
    %387 = tpu.dynamic_rotate %368 by %c32_i32_105 dim 1 : vector<2x256xf32>, i32 -> vector<2x256xf32>
    %cst_106 = arith.constant 0xFF800000 : f32
    %388 = vector.shape_cast %17 : vector<1x256xi1> to vector<1x256xi1>
    %389 = vector.broadcast %388 : vector<1x256xi1> to vector<2x256xi1>
    %390 = vector.broadcast %cst_106 : f32 to vector<2x256xf32>
    %391 = arith.select %389, %387, %390 : vector<2x256xi1>, vector<2x256xf32>
    %392 = arith.maximumf %386, %391 : vector<2x256xf32>
    %c255_i32_107 = arith.constant 255 : i32
    %393 = tpu.dynamic_rotate %392 by %c255_i32_107 dim 1 : vector<2x256xf32>, i32 -> vector<2x256xf32>
    %cst_108 = arith.constant 0xFF800000 : f32
    %394 = vector.shape_cast %3 : vector<1x256xi1> to vector<1x256xi1>
    %395 = vector.broadcast %394 : vector<1x256xi1> to vector<2x256xi1>
    %396 = vector.broadcast %cst_108 : f32 to vector<2x256xf32>
    %397 = arith.select %395, %393, %396 : vector<2x256xi1>, vector<2x256xf32>
    %398 = arith.maximumf %392, %397 : vector<2x256xf32>
    %c1_i32_109 = arith.constant 1 : i32
    %399 = tpu.dynamic_rotate %392 by %c1_i32_109 dim 1 : vector<2x256xf32>, i32 -> vector<2x256xf32>
    %cst_110 = arith.constant 0xFF800000 : f32
    %400 = vector.shape_cast %5 : vector<1x256xi1> to vector<1x256xi1>
    %401 = vector.broadcast %400 : vector<1x256xi1> to vector<2x256xi1>
    %402 = vector.broadcast %cst_110 : f32 to vector<2x256xf32>
    %403 = arith.select %401, %399, %402 : vector<2x256xi1>, vector<2x256xf32>
    %404 = arith.maximumf %398, %403 : vector<2x256xf32>
    %c254_i32_111 = arith.constant 254 : i32
    %405 = tpu.dynamic_rotate %392 by %c254_i32_111 dim 1 : vector<2x256xf32>, i32 -> vector<2x256xf32>
    %cst_112 = arith.constant 0xFF800000 : f32
    %406 = vector.shape_cast %7 : vector<1x256xi1> to vector<1x256xi1>
    %407 = vector.broadcast %406 : vector<1x256xi1> to vector<2x256xi1>
    %408 = vector.broadcast %cst_112 : f32 to vector<2x256xf32>
    %409 = arith.select %407, %405, %408 : vector<2x256xi1>, vector<2x256xf32>
    %410 = arith.maximumf %404, %409 : vector<2x256xf32>
    %c2_i32_113 = arith.constant 2 : i32
    %411 = tpu.dynamic_rotate %392 by %c2_i32_113 dim 1 : vector<2x256xf32>, i32 -> vector<2x256xf32>
    %cst_114 = arith.constant 0xFF800000 : f32
    %412 = vector.shape_cast %9 : vector<1x256xi1> to vector<1x256xi1>
    %413 = vector.broadcast %412 : vector<1x256xi1> to vector<2x256xi1>
    %414 = vector.broadcast %cst_114 : f32 to vector<2x256xf32>
    %415 = arith.select %413, %411, %414 : vector<2x256xi1>, vector<2x256xf32>
    %416 = arith.maximumf %410, %415 : vector<2x256xf32>
    %c240_i32_115 = arith.constant 240 : i32
    %417 = tpu.dynamic_rotate %416 by %c240_i32_115 dim 1 : vector<2x256xf32>, i32 -> vector<2x256xf32>
    %cst_116 = arith.constant 0xFF800000 : f32
    %418 = vector.shape_cast %11 : vector<1x256xi1> to vector<1x256xi1>
    %419 = vector.broadcast %418 : vector<1x256xi1> to vector<2x256xi1>
    %420 = vector.broadcast %cst_116 : f32 to vector<2x256xf32>
    %421 = arith.select %419, %417, %420 : vector<2x256xi1>, vector<2x256xf32>
    %422 = arith.maximumf %416, %421 : vector<2x256xf32>
    %c16_i32_117 = arith.constant 16 : i32
    %423 = tpu.dynamic_rotate %416 by %c16_i32_117 dim 1 : vector<2x256xf32>, i32 -> vector<2x256xf32>
    %cst_118 = arith.constant 0xFF800000 : f32
    %424 = vector.shape_cast %13 : vector<1x256xi1> to vector<1x256xi1>
    %425 = vector.broadcast %424 : vector<1x256xi1> to vector<2x256xi1>
    %426 = vector.broadcast %cst_118 : f32 to vector<2x256xf32>
    %427 = arith.select %425, %423, %426 : vector<2x256xi1>, vector<2x256xf32>
    %428 = arith.maximumf %422, %427 : vector<2x256xf32>
    %c224_i32_119 = arith.constant 224 : i32
    %429 = tpu.dynamic_rotate %416 by %c224_i32_119 dim 1 : vector<2x256xf32>, i32 -> vector<2x256xf32>
    %cst_120 = arith.constant 0xFF800000 : f32
    %430 = vector.shape_cast %15 : vector<1x256xi1> to vector<1x256xi1>
    %431 = vector.broadcast %430 : vector<1x256xi1> to vector<2x256xi1>
    %432 = vector.broadcast %cst_120 : f32 to vector<2x256xf32>
    %433 = arith.select %431, %429, %432 : vector<2x256xi1>, vector<2x256xf32>
    %434 = arith.maximumf %428, %433 : vector<2x256xf32>
    %c32_i32_121 = arith.constant 32 : i32
    %435 = tpu.dynamic_rotate %416 by %c32_i32_121 dim 1 : vector<2x256xf32>, i32 -> vector<2x256xf32>
    %cst_122 = arith.constant 0xFF800000 : f32
    %436 = vector.shape_cast %17 : vector<1x256xi1> to vector<1x256xi1>
    %437 = vector.broadcast %436 : vector<1x256xi1> to vector<2x256xi1>
    %438 = vector.broadcast %cst_122 : f32 to vector<2x256xf32>
    %439 = arith.select %437, %435, %438 : vector<2x256xi1>, vector<2x256xf32>
    %440 = arith.maximumf %434, %439 : vector<2x256xf32>
    %441 = vector.extract_strided_slice %22 {offsets = [0, 0], sizes = [8, 1], strides = [1, 1]} : vector<8x2xf32> to vector<8x1xf32>
    %442 = vector.extract_strided_slice %296 {offsets = [0, 0], sizes = [1, 256], strides = [1, 1]} : vector<2x256xf32> to vector<1x256xf32>
    %443 = vector.broadcast %441 : vector<8x1xf32> to vector<8x256xf32>
    %444 = vector.broadcast %442 : vector<1x256xf32> to vector<8x256xf32>
    %445 = arith.mulf %443, %444 : vector<8x256xf32>
    %446 = vector.extract_strided_slice %22 {offsets = [0, 1], sizes = [8, 1], strides = [1, 1]} : vector<8x2xf32> to vector<8x1xf32>
    %447 = vector.extract_strided_slice %296 {offsets = [1, 0], sizes = [1, 256], strides = [1, 1]} : vector<2x256xf32> to vector<1x256xf32>
    %448 = vector.broadcast %446 : vector<8x1xf32> to vector<8x256xf32>
    %449 = vector.broadcast %447 : vector<1x256xf32> to vector<8x256xf32>
    %450 = arith.mulf %448, %449 : vector<8x256xf32>
    %451 = arith.addf %445, %450 : vector<8x256xf32>
    %452 = vector.extract_strided_slice %24 {offsets = [0, 0], sizes = [8, 1], strides = [1, 1]} : vector<8x2xf32> to vector<8x1xf32>
    %453 = vector.extract_strided_slice %344 {offsets = [0, 0], sizes = [1, 256], strides = [1, 1]} : vector<2x256xf32> to vector<1x256xf32>
    %454 = vector.broadcast %452 : vector<8x1xf32> to vector<8x256xf32>
    %455 = vector.broadcast %453 : vector<1x256xf32> to vector<8x256xf32>
    %456 = arith.mulf %454, %455 : vector<8x256xf32>
    %457 = vector.extract_strided_slice %24 {offsets = [0, 1], sizes = [8, 1], strides = [1, 1]} : vector<8x2xf32> to vector<8x1xf32>
    %458 = vector.extract_strided_slice %344 {offsets = [1, 0], sizes = [1, 256], strides = [1, 1]} : vector<2x256xf32> to vector<1x256xf32>
    %459 = vector.broadcast %457 : vector<8x1xf32> to vector<8x256xf32>
    %460 = vector.broadcast %458 : vector<1x256xf32> to vector<8x256xf32>
    %461 = arith.mulf %459, %460 : vector<8x256xf32>
    %462 = arith.addf %456, %461 : vector<8x256xf32>
    %463 = arith.addf %451, %462 : vector<8x256xf32>
    %464 = vector.extract_strided_slice %26 {offsets = [0, 0], sizes = [8, 1], strides = [1, 1]} : vector<8x2xf32> to vector<8x1xf32>
    %465 = vector.extract_strided_slice %392 {offsets = [0, 0], sizes = [1, 256], strides = [1, 1]} : vector<2x256xf32> to vector<1x256xf32>
    %466 = vector.broadcast %464 : vector<8x1xf32> to vector<8x256xf32>
    %467 = vector.broadcast %465 : vector<1x256xf32> to vector<8x256xf32>
    %468 = arith.mulf %466, %467 : vector<8x256xf32>
    %469 = vector.extract_strided_slice %26 {offsets = [0, 1], sizes = [8, 1], strides = [1, 1]} : vector<8x2xf32> to vector<8x1xf32>
    %470 = vector.extract_strided_slice %392 {offsets = [1, 0], sizes = [1, 256], strides = [1, 1]} : vector<2x256xf32> to vector<1x256xf32>
    %471 = vector.broadcast %469 : vector<8x1xf32> to vector<8x256xf32>
    %472 = vector.broadcast %470 : vector<1x256xf32> to vector<8x256xf32>
    %473 = arith.mulf %471, %472 : vector<8x256xf32>
    %474 = arith.addf %468, %473 : vector<8x256xf32>
    %475 = arith.addf %463, %474 : vector<8x256xf32>
    %476 = vector.extract_strided_slice %28 {offsets = [0, 0], sizes = [8, 1], strides = [1, 1]} : vector<8x2xf32> to vector<8x1xf32>
    %477 = vector.extract_strided_slice %440 {offsets = [0, 0], sizes = [1, 256], strides = [1, 1]} : vector<2x256xf32> to vector<1x256xf32>
    %478 = vector.broadcast %476 : vector<8x1xf32> to vector<8x256xf32>
    %479 = vector.broadcast %477 : vector<1x256xf32> to vector<8x256xf32>
    %480 = arith.mulf %478, %479 : vector<8x256xf32>
    %481 = vector.extract_strided_slice %28 {offsets = [0, 1], sizes = [8, 1], strides = [1, 1]} : vector<8x2xf32> to vector<8x1xf32>
    %482 = vector.extract_strided_slice %440 {offsets = [1, 0], sizes = [1, 256], strides = [1, 1]} : vector<2x256xf32> to vector<1x256xf32>
    %483 = vector.broadcast %481 : vector<8x1xf32> to vector<8x256xf32>
    %484 = vector.broadcast %482 : vector<1x256xf32> to vector<8x256xf32>
    %485 = arith.mulf %483, %484 : vector<8x256xf32>
    %486 = arith.addf %480, %485 : vector<8x256xf32>
    %487 = arith.addf %475, %486 : vector<8x256xf32>
    %488 = vector.broadcast %20 : vector<8x1xf32> to vector<8x256xf32>
    %489 = arith.addf %487, %488 : vector<8x256xf32>
    %490 = arith.negf %489 : vector<8x256xf32>
    %491 = math.exp %490 : vector<8x256xf32>
    %cst_123 = arith.constant 1.000000e+00 : f32
    %492 = vector.broadcast %cst_123 : f32 to vector<8x256xf32>
    %493 = arith.addf %492, %491 : vector<8x256xf32>
    %494 = arith.divf %492, %493 : vector<8x256xf32>
    %495 = arith.mulf %489, %494 : vector<8x256xf32>
    %c1_124 = arith.constant 1 : index
    %c0_125 = arith.constant 0 : index
    %c0_126 = arith.constant 0 : index
    %496 = vector.load %arg7[%c1_124, %c0_125, %c0_126] : memref<2x8x256xf32, #tpu.memory_space<vmem>>, vector<1x8x256xf32>
    %497 = vector.shape_cast %496 : vector<1x8x256xf32> to vector<8x256xf32>
    %498 = vector.shape_cast %495 : vector<8x256xf32> to vector<1x8x256xf32>
    tpu.vector_store %arg7[%c1_124, %c0_125, %c0_126], %498 {strides = array<i32>} : memref<2x8x256xf32, #tpu.memory_space<vmem>>, vector<1x8x256xf32>,
    return
  }
  func.func @transform_0(%arg0: i32) -> (i32, i32, i32) {
    %c0_i32 = arith.constant 0 : i32
    %c0_i32_0 = arith.constant 0 : i32
    %c0_i32_1 = arith.constant 0 : i32
    return %arg0, %c0_i32, %c0_i32_0 : i32, i32, i32
  }
  func.func @transform_1(%arg0: i32) -> (i32, i32) {
    %c0_i32 = arith.constant 0 : i32
    %c0_i32_0 = arith.constant 0 : i32
    %c0_i32_1 = arith.constant 0 : i32
    return %c0_i32, %c0_i32_0 : i32, i32
  }
  func.func @transform_2(%arg0: i32) -> (i32, i32) {
    %c0_i32 = arith.constant 0 : i32
    %c0_i32_0 = arith.constant 0 : i32
    %c0_i32_1 = arith.constant 0 : i32
    return %c0_i32, %c0_i32_0 : i32, i32
  }
  func.func @transform_3(%arg0: i32) -> (i32, i32, i32) {
    %c0_i32 = arith.constant 0 : i32
    %c0_i32_0 = arith.constant 0 : i32
    %c0_i32_1 = arith.constant 0 : i32
    %c0_i32_2 = arith.constant 0 : i32
    return %c0_i32, %c0_i32_0, %c0_i32_1 : i32, i32, i32
  }
  func.func @transform_4(%arg0: i32) -> (i32, i32) {
    %c0_i32 = arith.constant 0 : i32
    %c0_i32_0 = arith.constant 0 : i32
    %c0_i32_1 = arith.constant 0 : i32
    return %c0_i32, %c0_i32_0 : i32, i32
  }
  func.func @transform_5(%arg0: i32) -> (i32, i32) {
    %c0_i32 = arith.constant 0 : i32
    %c0_i32_0 = arith.constant 0 : i32
    %c0_i32_1 = arith.constant 0 : i32
    return %c0_i32, %c0_i32_0 : i32, i32
  }
  func.func @transform_6(%arg0: i32) -> (i32, i32, i32) {
    %c0_i32 = arith.constant 0 : i32
    %c0_i32_0 = arith.constant 0 : i32
    %c0_i32_1 = arith.constant 0 : i32
    return %arg0, %c0_i32, %c0_i32_0 : i32, i32, i32
  }
}

</mosaic_0001>

<llo_original>
// kernel: tpu_custom_call.1
$region0: #{tpu_custom_call.1}
  #allocation0 [shape = 'u32[]', space=smem, size = 0x4, offset = 0x4, fixed_abs, tag = 'smem constant byte address 0x4 - core index']
  #allocation1 [shape = 'u32[144,128]{1,0:T(1,128)}', space=vmem, size = 0x12000, scoped, tag = 'internal scratch']
  %s0 = inlined_call_operand.vmem [shape: f32[2,4,256], index: 0, kind: input, shape index: {}]
  %s1 = inlined_call_operand.vmem [shape: f32[2,4], index: 1, kind: input, shape index: {}]
  %s2 = inlined_call_operand.vmem [shape: f32[2,1], index: 2, kind: input, shape index: {}]
  %s3 = inlined_call_operand.vmem [shape: f32[4,8,2], index: 3, kind: input, shape index: {}]
  %s4 = inlined_call_operand.vmem [shape: f32[8,1], index: 4, kind: input, shape index: {}]
  %s5 = inlined_call_operand.vmem [shape: s32[2,256], index: 5, kind: input, shape index: {}]
  %s6 = inlined_call_operand.hbm [shape: f32[2,8,256], index: 6, kind: output, shape index: {}]
  %s7 = sld [smem:[#allocation0]]
  $region34: #{tpu_custom_call.1} parent=0
    _
  %s9 = ssub.s32 1, %s7
  %s10 = scalar_select 0, %s9, %s7
  $region1: #{tpu_custom_call.1} parent=0
    #allocation2 [shape = 'u8[16384]{0}', space=vmem, size = 0x4000, scoped, tag = 'output window, operand 0, single buffered']
    #allocation3 [shape = 's32[1]{0}', space=sflag, size = 0x4, scoped, tag = 'scoped memory for tpu_custom_call.1']
    %11 = vsyncpa [#allocation3], 0
    // Predicated region
    $region2: #{tpu_custom_call.1} parent=1 // pred_check
      _
    $region3: #{tpu_custom_call.1} parent=1 // pred_check_branch
      %13 = sbr.rel (0) target = $region5
    $region4: #{tpu_custom_call.1} parent=1 // pred_region
      _
    $region5: #{tpu_custom_call.1} parent=1 // pred_fallthru
      _
    // Predicated region
    $region6: #{tpu_custom_call.1} parent=1 // pred_check
      _
    $region7: #{tpu_custom_call.1} parent=1 // pred_check_branch
      %15 = sbr.rel (0) target = $region9
    $region8: #{tpu_custom_call.1} parent=1 // pred_region
      _
    $region9: #{tpu_custom_call.1} parent=1 // pred_fallthru
      _
    // Predicated region
    $region10: #{tpu_custom_call.1} parent=1 // pred_check
      _
    $region11: #{tpu_custom_call.1} parent=1 // pred_check_branch
      %17 = sbr.rel (0) target = $region13
    $region12: #{tpu_custom_call.1} parent=1 // pred_region
      _
    $region13: #{tpu_custom_call.1} parent=1 // pred_fallthru
      _
    // Predicated region
    $region14: #{tpu_custom_call.1} parent=1 // pred_check
      _
    $region15: #{tpu_custom_call.1} parent=1 // pred_check_branch
      %19 = sbr.rel (0) target = $region17
    $region16: #{tpu_custom_call.1} parent=1 // pred_region
      _
    $region17: #{tpu_custom_call.1} parent=1 // pred_fallthru
      _
    // Predicated region
    $region18: #{tpu_custom_call.1} parent=1 // pred_check
      _
    $region19: #{tpu_custom_call.1} parent=1 // pred_check_branch
      %21 = sbr.rel (0) target = $region21
    $region20: #{tpu_custom_call.1} parent=1 // pred_region
      _
    $region21: #{tpu_custom_call.1} parent=1 // pred_fallthru
      _
    // Predicated region
    $region22: #{tpu_custom_call.1} parent=1 // pred_check
      _
    $region23: #{tpu_custom_call.1} parent=1 // pred_check_branch
      %23 = sbr.rel (0) target = $region25
    $region24: #{tpu_custom_call.1} parent=1 // pred_region
      _
    $region25: #{tpu_custom_call.1} parent=1 // pred_fallthru
      _
    %v24 = vld [vmem:[%s5] ss:$2 sm:$0x3]
    %s25 = scalar_lea.vmem %s5, 1
    %v26 = vld [vmem:[%s25] ss:$2 sm:$0x3]
    %vm27 = vcmp.lt.s32.totalorder %v24, 15
    %vm28 = vcmp.ge.s32.totalorder %v24, 1
    %vm29 = vcmp.lt.s32.totalorder %v24, 14
    %vm30 = vcmp.ge.s32.totalorder %v24, 2
    %vm31 = vcmp.lt.s32.totalorder %v26, 15
    %vm32 = vcmp.ge.s32.totalorder %v26, 1
    %vm33 = vcmp.lt.s32.totalorder %v26, 14
    %vm34 = vcmp.ge.s32.totalorder %v26, 2
    %v35 = vld [vmem:[%s1] sm:$0x3]
    %v36 = vld [vmem:[%s2] sm:$0x3]
    %v37 = vld [vmem:[%s4] sm:$0xff]
    %v38 = vld [vmem:[%s3] sm:$0xff]
    %s39 = scalar_lea.vmem %s3, 8
    %v40 = vld [vmem:[%s39] sm:$0xff]
    %s41 = scalar_lea.vmem %s3, 16
    %v42 = vld [vmem:[%s41] sm:$0xff]
    %s43 = scalar_lea.vmem %s3, 24
    %v44 = vld [vmem:[%s43] sm:$0xff]
    %v45 = vld [vmem:[%s0] sm:$0xff]
    %47 = vset.pattern.permute.xlu0 0
    %48 = vperm.xlu0 %47, %v35
    %v49 = vpop.permute.xlu0 %48
    %v52 = vlaneseq
    %v53 = vshrl.u32 %v52, 7
    %v54 = vsub.s32 0, %v53
    %v55 = vrot.slane %v45, %v54
    %v56 = vlaneseq
    %v57 = vshrl.u32 %v56, 7
    %v58 = vsub.s32 4, %v57
    %v59 = vrot.slane %v45, %v58
    %v62 = vlaneseq
    %v63 = vshrl.u32 %v62, 7
    %v64 = vsub.s32 0, %v63
    %v65 = vrot.slane %v55, %v64
    %v66 = vlaneseq
    %v67 = vshrl.u32 %v66, 7
    %v68 = vsub.s32 0, %v67
    %v69 = vrot.slane %v59, %v68
    %v70 = vmul.f32 %v49, %v65
    %v71 = vmul.f32 %v49, %v69
    %72 = vset.pattern.permute.xlu0 1
    %73 = vperm.xlu0 %72, %v35
    %v74 = vpop.permute.xlu0 %73
    %v76 = vlaneseq
    %v77 = vshrl.u32 %v76, 7
    %v78 = vsub.s32 1, %v77
    %v79 = vrot.slane %v45, %v78
    %v80 = vlaneseq
    %v81 = vshrl.u32 %v80, 7
    %v82 = vsub.s32 5, %v81
    %v83 = vrot.slane %v45, %v82
    %v86 = vlaneseq
    %v87 = vshrl.u32 %v86, 7
    %v88 = vsub.s32 1, %v87
    %v89 = vrot.slane %v79, %v88
    %v90 = vlaneseq
    %v91 = vshrl.u32 %v90, 7
    %v92 = vsub.s32 1, %v91
    %v93 = vrot.slane %v83, %v92
    %v94 = vmul.f32 %v74, %v89
    %v95 = vmul.f32 %v74, %v93
    %v96 = vadd.f32 %v70, %v94
    %v97 = vadd.f32 %v71, %v95
    %98 = vset.pattern.permute.xlu0 2
    %99 = vperm.xlu0 %98, %v35
    %v100 = vpop.permute.xlu0 %99
    %v102 = vlaneseq
    %v103 = vshrl.u32 %v102, 7
    %v104 = vsub.s32 2, %v103
    %v105 = vrot.slane %v45, %v104
    %v106 = vlaneseq
    %v107 = vshrl.u32 %v106, 7
    %v108 = vsub.s32 6, %v107
    %v109 = vrot.slane %v45, %v108
    %v112 = vlaneseq
    %v113 = vshrl.u32 %v112, 7
    %v114 = vsub.s32 2, %v113
    %v115 = vrot.slane %v105, %v114
    %v116 = vlaneseq
    %v117 = vshrl.u32 %v116, 7
    %v118 = vsub.s32 2, %v117
    %v119 = vrot.slane %v109, %v118
    %v120 = vmul.f32 %v100, %v115
    %v121 = vmul.f32 %v100, %v119
    %v122 = vadd.f32 %v96, %v120
    %v123 = vadd.f32 %v97, %v121
    %124 = vset.pattern.permute.xlu0 3
    %125 = vperm.xlu0 %124, %v35
    %v126 = vpop.permute.xlu0 %125
    %v128 = vlaneseq
    %v129 = vshrl.u32 %v128, 7
    %v130 = vsub.s32 3, %v129
    %v131 = vrot.slane %v45, %v130
    %v132 = vlaneseq
    %v133 = vshrl.u32 %v132, 7
    %v134 = vsub.s32 7, %v133
    %v135 = vrot.slane %v45, %v134
    %v138 = vlaneseq
    %v139 = vshrl.u32 %v138, 7
    %v140 = vsub.s32 3, %v139
    %v141 = vrot.slane %v131, %v140
    %v142 = vlaneseq
    %v143 = vshrl.u32 %v142, 7
    %v144 = vsub.s32 3, %v143
    %v145 = vrot.slane %v135, %v144
    %v146 = vmul.f32 %v126, %v141
    %v147 = vmul.f32 %v126, %v145
    %v148 = vadd.f32 %v122, %v146
    %v149 = vadd.f32 %v123, %v147
    %151 = vset.pattern.permute.xlu0 0
    %152 = vperm.xlu0 %151, %v36
    %v153 = vpop.permute.xlu0 %152
    %v155 = vadd.f32 %v148, %v153
    %v156 = vadd.f32 %v149, %v153
    %v157 = vxor.u32 %v155, 2147483648
    %v158 = vxor.u32 %v156, 2147483648
    %v159 = vmul.f32 %v157, 1.442695
    %v160 = vpow.pop %v159
    %v161 = vmul.f32 %v158, 1.442695
    %v162 = vpow.pop %v161
    %v163 = vadd.f32 %v160, 1.0
    %v164 = vadd.f32 %v162, 1.0
    %v165 = vrcp.pop %v163
    %v166 = vmul.f32 1.0, %v165
    %v167 = vrcp.pop %v164
    %v168 = vmul.f32 1.0, %v167
    %v169 = vmul.f32 %v155, %v166
    %v170 = vmul.f32 %v156, %v168
    %171 = vrot.lane.b32.xlu0 %v169, 127
    %v172 = vpop.permute.xlu0 %171
    %173 = vrot.lane.b32.xlu0 %v170, 127
    %v174 = vpop.permute.xlu0 %173
    %v175 = vlaneseq
    %v176 = vand.u32 %v175, 127
    %vm177 = vcmp.lt.s32.totalorder %v176, 127
    %v178 = vsel %vm177, %v172, %v174
    %v179 = vsel %vm177, %v174, %v172
    %v180 = vsel %vm27, 1, 0
    %v181 = vlaneseq
    %v182 = vshrl.u32 %v181, 7
    %v183 = vsub.s32 0, %v182
    %v184 = vrot.slane %v180, %v183
    %v185 = vlaneseq
    %v186 = vshrl.u32 %v185, 7
    %v187 = vsub.s32 1, %v186
    %v188 = vrot.slane %v180, %v187
    %vm189 = vcmp.eq.s32.totalorder %v184, 1
    %vm190 = vcmp.eq.s32.totalorder %v188, 1
    %v191 = vsel %vm189, %v178, -inf
    %v192 = vsel %vm190, %v179, -inf
    %v193 = vmax.f32 %v169, %v191
    %v194 = vmax.f32 %v170, %v192
    %195 = vrot.lane.b32.xlu0 %v169, 1
    %v196 = vpop.permute.xlu0 %195
    %197 = vrot.lane.b32.xlu0 %v170, 1
    %v198 = vpop.permute.xlu0 %197
    %vm199 = vcmp.lt.s32.totalorder %v176, 1
    %v200 = vsel %vm199, %v196, %v198
    %v201 = vsel %vm199, %v198, %v196
    %v202 = vsel %vm28, 1, 0
    %v203 = vlaneseq
    %v204 = vshrl.u32 %v203, 7
    %v205 = vsub.s32 0, %v204
    %v206 = vrot.slane %v202, %v205
    %v207 = vlaneseq
    %v208 = vshrl.u32 %v207, 7
    %v209 = vsub.s32 1, %v208
    %v210 = vrot.slane %v202, %v209
    %vm211 = vcmp.eq.s32.totalorder %v206, 1
    %vm212 = vcmp.eq.s32.totalorder %v210, 1
    %v213 = vsel %vm211, %v201, -inf
    %v214 = vsel %vm212, %v200, -inf
    %v215 = vmax.f32 %v193, %v213
    %v216 = vmax.f32 %v194, %v214
    %217 = vrot.lane.b32.xlu0 %v169, 126
    %v218 = vpop.permute.xlu0 %217
    %219 = vrot.lane.b32.xlu0 %v170, 126
    %v220 = vpop.permute.xlu0 %219
    %vm221 = vcmp.lt.s32.totalorder %v176, 126
    %v222 = vsel %vm221, %v218, %v220
    %v223 = vsel %vm221, %v220, %v218
    %v224 = vsel %vm29, 1, 0
    %v225 = vlaneseq
    %v226 = vshrl.u32 %v225, 7
    %v227 = vsub.s32 0, %v226
    %v228 = vrot.slane %v224, %v227
    %v229 = vlaneseq
    %v230 = vshrl.u32 %v229, 7
    %v231 = vsub.s32 1, %v230
    %v232 = vrot.slane %v224, %v231
    %vm233 = vcmp.eq.s32.totalorder %v228, 1
    %vm234 = vcmp.eq.s32.totalorder %v232, 1
    %v235 = vsel %vm233, %v222, -inf
    %v236 = vsel %vm234, %v223, -inf
    %v237 = vmax.f32 %v215, %v235
    %v238 = vmax.f32 %v216, %v236
    %239 = vrot.lane.b32.xlu0 %v169, 2
    %v240 = vpop.permute.xlu0 %239
    %241 = vrot.lane.b32.xlu0 %v170, 2
    %v242 = vpop.permute.xlu0 %241
    %vm243 = vcmp.lt.s32.totalorder %v176, 2
    %v244 = vsel %vm243, %v240, %v242
    %v245 = vsel %vm243, %v242, %v240
    %v246 = vsel %vm30, 1, 0
    %v247 = vlaneseq
    %v248 = vshrl.u32 %v247, 7
    %v249 = vsub.s32 0, %v248
    %v250 = vrot.slane %v246, %v249
    %v251 = vlaneseq
    %v252 = vshrl.u32 %v251, 7
    %v253 = vsub.s32 1, %v252
    %v254 = vrot.slane %v246, %v253
    %vm255 = vcmp.eq.s32.totalorder %v250, 1
    %vm256 = vcmp.eq.s32.totalorder %v254, 1
    %v257 = vsel %vm255, %v245, -inf
    %v258 = vsel %vm256, %v244, -inf
    %v259 = vmax.f32 %v237, %v257
    %v260 = vmax.f32 %v238, %v258
    %261 = vrot.lane.b32.xlu0 %v259, 112
    %v262 = vpop.permute.xlu0 %261
    %263 = vrot.lane.b32.xlu0 %v260, 112
    %v264 = vpop.permute.xlu0 %263
    %vm265 = vcmp.lt.s32.totalorder %v176, 112
    %v266 = vsel %vm265, %v262, %v264
    %v267 = vsel %vm265, %v264, %v262
    %v268 = vsel %vm31, 1, 0
    %v269 = vlaneseq
    %v270 = vshrl.u32 %v269, 7
    %v271 = vsub.s32 0, %v270
    %v272 = vrot.slane %v268, %v271
    %v273 = vlaneseq
    %v274 = vshrl.u32 %v273, 7
    %v275 = vsub.s32 1, %v274
    %v276 = vrot.slane %v268, %v275
    %vm277 = vcmp.eq.s32.totalorder %v272, 1
    %vm278 = vcmp.eq.s32.totalorder %v276, 1
    %v279 = vsel %vm277, %v266, -inf
    %v280 = vsel %vm278, %v267, -inf
    %v281 = vmax.f32 %v259, %v279
    %v282 = vmax.f32 %v260, %v280
    %283 = vrot.lane.b32.xlu0 %v259, 16
    %v284 = vpop.permute.xlu0 %283
    %285 = vrot.lane.b32.xlu0 %v260, 16
    %v286 = vpop.permute.xlu0 %285
    %vm287 = vcmp.lt.s32.totalorder %v176, 16
    %v288 = vsel %vm287, %v284, %v286
    %v289 = vsel %vm287, %v286, %v284
    %v290 = vsel %vm32, 1, 0
    %v291 = vlaneseq
    %v292 = vshrl.u32 %v291, 7
    %v293 = vsub.s32 0, %v292
    %v294 = vrot.slane %v290, %v293
    %v295 = vlaneseq
    %v296 = vshrl.u32 %v295, 7
    %v297 = vsub.s32 1, %v296
    %v298 = vrot.slane %v290, %v297
    %vm299 = vcmp.eq.s32.totalorder %v294, 1
    %vm300 = vcmp.eq.s32.totalorder %v298, 1
    %v301 = vsel %vm299, %v289, -inf
    %v302 = vsel %vm300, %v288, -inf
    %v303 = vmax.f32 %v281, %v301
    %v304 = vmax.f32 %v282, %v302
    %305 = vrot.lane.b32.xlu0 %v259, 96
    %v306 = vpop.permute.xlu0 %305
    %307 = vrot.lane.b32.xlu0 %v260, 96
    %v308 = vpop.permute.xlu0 %307
    %vm309 = vcmp.lt.s32.totalorder %v176, 96
    %v310 = vsel %vm309, %v306, %v308
    %v311 = vsel %vm309, %v308, %v306
    %v312 = vsel %vm33, 1, 0
    %v313 = vlaneseq
    %v314 = vshrl.u32 %v313, 7
    %v315 = vsub.s32 0, %v314
    %v316 = vrot.slane %v312, %v315
    %v317 = vlaneseq
    %v318 = vshrl.u32 %v317, 7
    %v319 = vsub.s32 1, %v318
    %v320 = vrot.slane %v312, %v319
    %vm321 = vcmp.eq.s32.totalorder %v316, 1
    %vm322 = vcmp.eq.s32.totalorder %v320, 1
    %v323 = vsel %vm321, %v310, -inf
    %v324 = vsel %vm322, %v311, -inf
    %v325 = vmax.f32 %v303, %v323
    %v326 = vmax.f32 %v304, %v324
    %327 = vrot.lane.b32.xlu0 %v259, 32
    %v328 = vpop.permute.xlu0 %327
    %329 = vrot.lane.b32.xlu0 %v260, 32
    %v330 = vpop.permute.xlu0 %329
    %vm331 = vcmp.lt.s32.totalorder %v176, 32
    %v332 = vsel %vm331, %v328, %v330
    %v333 = vsel %vm331, %v330, %v328
    %v334 = vsel %vm34, 1, 0
    %v335 = vlaneseq
    %v336 = vshrl.u32 %v335, 7
    %v337 = vsub.s32 0, %v336
    %v338 = vrot.slane %v334, %v337
    %v339 = vlaneseq
    %v340 = vshrl.u32 %v339, 7
    %v341 = vsub.s32 1, %v340
    %v342 = vrot.slane %v334, %v341
    %vm343 = vcmp.eq.s32.totalorder %v338, 1
    %vm344 = vcmp.eq.s32.totalorder %v342, 1
    %v345 = vsel %vm343, %v333, -inf
    %v346 = vsel %vm344, %v332, -inf
    %v347 = vmax.f32 %v325, %v345
    %v348 = vmax.f32 %v326, %v346
    %349 = vrot.lane.b32.xlu0 %v347, 127
    %v350 = vpop.permute.xlu0 %349
    %351 = vrot.lane.b32.xlu0 %v348, 127
    %v352 = vpop.permute.xlu0 %351
    %v353 = vsel %vm177, %v350, %v352
    %v354 = vsel %vm177, %v352, %v350
    %v355 = vsel %vm189, %v353, -inf
    %v356 = vsel %vm190, %v354, -inf
    %v357 = vmax.f32 %v347, %v355
    %v358 = vmax.f32 %v348, %v356
    %359 = vrot.lane.b32.xlu0 %v347, 1
    %v360 = vpop.permute.xlu0 %359
    %361 = vrot.lane.b32.xlu0 %v348, 1
    %v362 = vpop.permute.xlu0 %361
    %v363 = vsel %vm199, %v360, %v362
    %v364 = vsel %vm199, %v362, %v360
    %v365 = vsel %vm211, %v364, -inf
    %v366 = vsel %vm212, %v363, -inf
    %v367 = vmax.f32 %v357, %v365
    %v368 = vmax.f32 %v358, %v366
    %369 = vrot.lane.b32.xlu0 %v347, 126
    %v370 = vpop.permute.xlu0 %369
    %371 = vrot.lane.b32.xlu0 %v348, 126
    %v372 = vpop.permute.xlu0 %371
    %v373 = vsel %vm221, %v370, %v372
    %v374 = vsel %vm221, %v372, %v370
    %v375 = vsel %vm233, %v373, -inf
    %v376 = vsel %vm234, %v374, -inf
    %v377 = vmax.f32 %v367, %v375
    %v378 = vmax.f32 %v368, %v376
    %379 = vrot.lane.b32.xlu0 %v347, 2
    %v380 = vpop.permute.xlu0 %379
    %381 = vrot.lane.b32.xlu0 %v348, 2
    %v382 = vpop.permute.xlu0 %381
    %v383 = vsel %vm243, %v380, %v382
    %v384 = vsel %vm243, %v382, %v380
    %v385 = vsel %vm255, %v384, -inf
    %v386 = vsel %vm256, %v383, -inf
    %v387 = vmax.f32 %v377, %v385
    %v388 = vmax.f32 %v378, %v386
    %389 = vrot.lane.b32.xlu0 %v387, 112
    %v390 = vpop.permute.xlu0 %389
    %391 = vrot.lane.b32.xlu0 %v388, 112
    %v392 = vpop.permute.xlu0 %391
    %v393 = vsel %vm265, %v390, %v392
    %v394 = vsel %vm265, %v392, %v390
    %v395 = vsel %vm277, %v393, -inf
    %v396 = vsel %vm278, %v394, -inf
    %v397 = vmax.f32 %v387, %v395
    %v398 = vmax.f32 %v388, %v396
    %399 = vrot.lane.b32.xlu0 %v387, 16
    %v400 = vpop.permute.xlu0 %399
    %401 = vrot.lane.b32.xlu0 %v388, 16
    %v402 = vpop.permute.xlu0 %401
    %v403 = vsel %vm287, %v400, %v402
    %v404 = vsel %vm287, %v402, %v400
    %v405 = vsel %vm299, %v404, -inf
    %v406 = vsel %vm300, %v403, -inf
    %v407 = vmax.f32 %v397, %v405
    %v408 = vmax.f32 %v398, %v406
    %409 = vrot.lane.b32.xlu0 %v387, 96
    %v410 = vpop.permute.xlu0 %409
    %411 = vrot.lane.b32.xlu0 %v388, 96
    %v412 = vpop.permute.xlu0 %411
    %v413 = vsel %vm309, %v410, %v412
    %v414 = vsel %vm309, %v412, %v410
    %v415 = vsel %vm321, %v413, -inf
    %v416 = vsel %vm322, %v414, -inf
    %v417 = vmax.f32 %v407, %v415
    %v418 = vmax.f32 %v408, %v416
    %419 = vrot.lane.b32.xlu0 %v387, 32
    %v420 = vpop.permute.xlu0 %419
    %421 = vrot.lane.b32.xlu0 %v388, 32
    %v422 = vpop.permute.xlu0 %421
    %v423 = vsel %vm331, %v420, %v422
    %v424 = vsel %vm331, %v422, %v420
    %v425 = vsel %vm343, %v424, -inf
    %v426 = vsel %vm344, %v423, -inf
    %v427 = vmax.f32 %v417, %v425
    %v428 = vmax.f32 %v418, %v426
    %429 = vrot.lane.b32.xlu0 %v427, 127
    %v430 = vpop.permute.xlu0 %429
    %431 = vrot.lane.b32.xlu0 %v428, 127
    %v432 = vpop.permute.xlu0 %431
    %v433 = vsel %vm177, %v430, %v432
    %v434 = vsel %vm177, %v432, %v430
    %v435 = vsel %vm189, %v433, -inf
    %v436 = vsel %vm190, %v434, -inf
    %v437 = vmax.f32 %v427, %v435
    %v438 = vmax.f32 %v428, %v436
    %439 = vrot.lane.b32.xlu0 %v427, 1
    %v440 = vpop.permute.xlu0 %439
    %441 = vrot.lane.b32.xlu0 %v428, 1
    %v442 = vpop.permute.xlu0 %441
    %v443 = vsel %vm199, %v440, %v442
    %v444 = vsel %vm199, %v442, %v440
    %v445 = vsel %vm211, %v444, -inf
    %v446 = vsel %vm212, %v443, -inf
    %v447 = vmax.f32 %v437, %v445
    %v448 = vmax.f32 %v438, %v446
    %449 = vrot.lane.b32.xlu0 %v427, 126
    %v450 = vpop.permute.xlu0 %449
    %451 = vrot.lane.b32.xlu0 %v428, 126
    %v452 = vpop.permute.xlu0 %451
    %v453 = vsel %vm221, %v450, %v452
    %v454 = vsel %vm221, %v452, %v450
    %v455 = vsel %vm233, %v453, -inf
    %v456 = vsel %vm234, %v454, -inf
    %v457 = vmax.f32 %v447, %v455
    %v458 = vmax.f32 %v448, %v456
    %459 = vrot.lane.b32.xlu0 %v427, 2
    %v460 = vpop.permute.xlu0 %459
    %461 = vrot.lane.b32.xlu0 %v428, 2
    %v462 = vpop.permute.xlu0 %461
    %v463 = vsel %vm243, %v460, %v462
    %v464 = vsel %vm243, %v462, %v460
    %v465 = vsel %vm255, %v464, -inf
    %v466 = vsel %vm256, %v463, -inf
    %v467 = vmax.f32 %v457, %v465
    %v468 = vmax.f32 %v458, %v466
    %469 = vrot.lane.b32.xlu0 %v467, 112
    %v470 = vpop.permute.xlu0 %469
    %471 = vrot.lane.b32.xlu0 %v468, 112
    %v472 = vpop.permute.xlu0 %471
    %v473 = vsel %vm265, %v470, %v472
    %v474 = vsel %vm265, %v472, %v470
    %v475 = vsel %vm277, %v473, -inf
    %v476 = vsel %vm278, %v474, -inf
    %v477 = vmax.f32 %v467, %v475
    %v478 = vmax.f32 %v468, %v476
    %479 = vrot.lane.b32.xlu0 %v467, 16
    %v480 = vpop.permute.xlu0 %479
    %481 = vrot.lane.b32.xlu0 %v468, 16
    %v482 = vpop.permute.xlu0 %481
    %v483 = vsel %vm287, %v480, %v482
    %v484 = vsel %vm287, %v482, %v480
    %v485 = vsel %vm299, %v484, -inf
    %v486 = vsel %vm300, %v483, -inf
    %v487 = vmax.f32 %v477, %v485
    %v488 = vmax.f32 %v478, %v486
    %489 = vrot.lane.b32.xlu0 %v467, 96
    %v490 = vpop.permute.xlu0 %489
    %491 = vrot.lane.b32.xlu0 %v468, 96
    %v492 = vpop.permute.xlu0 %491
    %v493 = vsel %vm309, %v490, %v492
    %v494 = vsel %vm309, %v492, %v490
    %v495 = vsel %vm321, %v493, -inf
    %v496 = vsel %vm322, %v494, -inf
    %v497 = vmax.f32 %v487, %v495
    %v498 = vmax.f32 %v488, %v496
    %499 = vrot.lane.b32.xlu0 %v467, 32
    %v500 = vpop.permute.xlu0 %499
    %501 = vrot.lane.b32.xlu0 %v468, 32
    %v502 = vpop.permute.xlu0 %501
    %v503 = vsel %vm331, %v500, %v502
    %v504 = vsel %vm331, %v502, %v500
    %v505 = vsel %vm343, %v504, -inf
    %v506 = vsel %vm344, %v503, -inf
    %v507 = vmax.f32 %v497, %v505
    %v508 = vmax.f32 %v498, %v506
    %510 = vset.pattern.permute.xlu0 0
    %511 = vperm.xlu0 %510, %v38
    %v512 = vpop.permute.xlu0 %511
    %v514 = vlaneseq
    %v515 = vshrl.u32 %v514, 7
    %v516 = vsub.s32 0, %v515
    %v517 = vrot.slane %v169, %v516
    %v518 = vlaneseq
    %v519 = vshrl.u32 %v518, 7
    %v520 = vsub.s32 0, %v519
    %v521 = vrot.slane %v170, %v520
    %v522 = vmul.f32 %v512, %v517
    %v523 = vmul.f32 %v512, %v521
    %524 = vset.pattern.permute.xlu0 1
    %525 = vperm.xlu0 %524, %v38
    %v526 = vpop.permute.xlu0 %525
    %v528 = vlaneseq
    %v529 = vshrl.u32 %v528, 7
    %v530 = vsub.s32 1, %v529
    %v531 = vrot.slane %v169, %v530
    %v532 = vlaneseq
    %v533 = vshrl.u32 %v532, 7
    %v534 = vsub.s32 1, %v533
    %v535 = vrot.slane %v170, %v534
    %v536 = vmul.f32 %v526, %v531
    %v537 = vmul.f32 %v526, %v535
    %v538 = vadd.f32 %v522, %v536
    %v539 = vadd.f32 %v523, %v537
    %541 = vset.pattern.permute.xlu0 0
    %542 = vperm.xlu0 %541, %v40
    %v543 = vpop.permute.xlu0 %542
    %v545 = vlaneseq
    %v546 = vshrl.u32 %v545, 7
    %v547 = vsub.s32 0, %v546
    %v548 = vrot.slane %v347, %v547
    %v549 = vlaneseq
    %v550 = vshrl.u32 %v549, 7
    %v551 = vsub.s32 0, %v550
    %v552 = vrot.slane %v348, %v551
    %v553 = vmul.f32 %v543, %v548
    %v554 = vmul.f32 %v543, %v552
    %555 = vset.pattern.permute.xlu0 1
    %556 = vperm.xlu0 %555, %v40
    %v557 = vpop.permute.xlu0 %556
    %v559 = vlaneseq
    %v560 = vshrl.u32 %v559, 7
    %v561 = vsub.s32 1, %v560
    %v562 = vrot.slane %v347, %v561
    %v563 = vlaneseq
    %v564 = vshrl.u32 %v563, 7
    %v565 = vsub.s32 1, %v564
    %v566 = vrot.slane %v348, %v565
    %v567 = vmul.f32 %v557, %v562
    %v568 = vmul.f32 %v557, %v566
    %v569 = vadd.f32 %v553, %v567
    %v570 = vadd.f32 %v554, %v568
    %v571 = vadd.f32 %v538, %v569
    %v572 = vadd.f32 %v539, %v570
    %574 = vset.pattern.permute.xlu0 0
    %575 = vperm.xlu0 %574, %v42
    %v576 = vpop.permute.xlu0 %575
    %v578 = vlaneseq
    %v579 = vshrl.u32 %v578, 7
    %v580 = vsub.s32 0, %v579
    %v581 = vrot.slane %v427, %v580
    %v582 = vlaneseq
    %v583 = vshrl.u32 %v582, 7
    %v584 = vsub.s32 0, %v583
    %v585 = vrot.slane %v428, %v584
    %v586 = vmul.f32 %v576, %v581
    %v587 = vmul.f32 %v576, %v585
    %588 = vset.pattern.permute.xlu0 1
    %589 = vperm.xlu0 %588, %v42
    %v590 = vpop.permute.xlu0 %589
    %v592 = vlaneseq
    %v593 = vshrl.u32 %v592, 7
    %v594 = vsub.s32 1, %v593
    %v595 = vrot.slane %v427, %v594
    %v596 = vlaneseq
    %v597 = vshrl.u32 %v596, 7
    %v598 = vsub.s32 1, %v597
    %v599 = vrot.slane %v428, %v598
    %v600 = vmul.f32 %v590, %v595
    %v601 = vmul.f32 %v590, %v599
    %v602 = vadd.f32 %v586, %v600
    %v603 = vadd.f32 %v587, %v601
    %v604 = vadd.f32 %v571, %v602
    %v605 = vadd.f32 %v572, %v603
    %607 = vset.pattern.permute.xlu0 0
    %608 = vperm.xlu0 %607, %v44
    %v609 = vpop.permute.xlu0 %608
    %v611 = vlaneseq
    %v612 = vshrl.u32 %v611, 7
    %v613 = vsub.s32 0, %v612
    %v614 = vrot.slane %v507, %v613
    %v615 = vlaneseq
    %v616 = vshrl.u32 %v615, 7
    %v617 = vsub.s32 0, %v616
    %v618 = vrot.slane %v508, %v617
    %v619 = vmul.f32 %v609, %v614
    %v620 = vmul.f32 %v609, %v618
    %621 = vset.pattern.permute.xlu0 1
    %622 = vperm.xlu0 %621, %v44
    %v623 = vpop.permute.xlu0 %622
    %v625 = vlaneseq
    %v626 = vshrl.u32 %v625, 7
    %v627 = vsub.s32 1, %v626
    %v628 = vrot.slane %v507, %v627
    %v629 = vlaneseq
    %v630 = vshrl.u32 %v629, 7
    %v631 = vsub.s32 1, %v630
    %v632 = vrot.slane %v508, %v631
    %v633 = vmul.f32 %v623, %v628
    %v634 = vmul.f32 %v623, %v632
    %v635 = vadd.f32 %v619, %v633
    %v636 = vadd.f32 %v620, %v634
    %v637 = vadd.f32 %v604, %v635
    %v638 = vadd.f32 %v605, %v636
    %640 = vset.pattern.permute.xlu0 0
    %641 = vperm.xlu0 %640, %v37
    %v642 = vpop.permute.xlu0 %641
    %v644 = vadd.f32 %v637, %v642
    %v645 = vadd.f32 %v638, %v642
    %v646 = vxor.u32 %v644, 2147483648
    %v647 = vxor.u32 %v645, 2147483648
    %v648 = vmul.f32 %v646, 1.442695
    %v649 = vpow.pop %v648
    %v650 = vmul.f32 %v647, 1.442695
    %v651 = vpow.pop %v650
    %v652 = vadd.f32 %v649, 1.0
    %v653 = vadd.f32 %v651, 1.0
    %v654 = vrcp.pop %v652
    %v655 = vmul.f32 1.0, %v654
    %v656 = vrcp.pop %v653
    %v657 = vmul.f32 1.0, %v656
    %v658 = vmul.f32 %v644, %v655
    %v659 = vmul.f32 %v645, %v657
    %660 = vst [vmem:[#allocation2] sm:$0xff] %v658
    %661 = vst [vmem:[#allocation2 + $0x8] sm:$0xff] %v659
    %s662 = scalar_lea.vmem %s0, 8
    %v663 = vld [vmem:[%s662] sm:$0xff]
    %v665 = vlaneseq
    %v666 = vshrl.u32 %v665, 7
    %v667 = vsub.s32 0, %v666
    %v668 = vrot.slane %v663, %v667
    %v669 = vlaneseq
    %v670 = vshrl.u32 %v669, 7
    %v671 = vsub.s32 4, %v670
    %v672 = vrot.slane %v663, %v671
    %v675 = vlaneseq
    %v676 = vshrl.u32 %v675, 7
    %v677 = vsub.s32 0, %v676
    %v678 = vrot.slane %v668, %v677
    %v679 = vlaneseq
    %v680 = vshrl.u32 %v679, 7
    %v681 = vsub.s32 0, %v680
    %v682 = vrot.slane %v672, %v681
    %v683 = vmul.f32 %v49, %v678
    %v684 = vmul.f32 %v49, %v682
    %v685 = vlaneseq
    %v686 = vshrl.u32 %v685, 7
    %v687 = vsub.s32 1, %v686
    %v688 = vrot.slane %v663, %v687
    %v689 = vlaneseq
    %v690 = vshrl.u32 %v689, 7
    %v691 = vsub.s32 5, %v690
    %v692 = vrot.slane %v663, %v691
    %v695 = vlaneseq
    %v696 = vshrl.u32 %v695, 7
    %v697 = vsub.s32 1, %v696
    %v698 = vrot.slane %v688, %v697
    %v699 = vlaneseq
    %v700 = vshrl.u32 %v699, 7
    %v701 = vsub.s32 1, %v700
    %v702 = vrot.slane %v692, %v701
    %v703 = vmul.f32 %v74, %v698
    %v704 = vmul.f32 %v74, %v702
    %v705 = vadd.f32 %v683, %v703
    %v706 = vadd.f32 %v684, %v704
    %v707 = vlaneseq
    %v708 = vshrl.u32 %v707, 7
    %v709 = vsub.s32 2, %v708
    %v710 = vrot.slane %v663, %v709
    %v711 = vlaneseq
    %v712 = vshrl.u32 %v711, 7
    %v713 = vsub.s32 6, %v712
    %v714 = vrot.slane %v663, %v713
    %v717 = vlaneseq
    %v718 = vshrl.u32 %v717, 7
    %v719 = vsub.s32 2, %v718
    %v720 = vrot.slane %v710, %v719
    %v721 = vlaneseq
    %v722 = vshrl.u32 %v721, 7
    %v723 = vsub.s32 2, %v722
    %v724 = vrot.slane %v714, %v723
    %v725 = vmul.f32 %v100, %v720
    %v726 = vmul.f32 %v100, %v724
    %v727 = vadd.f32 %v705, %v725
    %v728 = vadd.f32 %v706, %v726
    %v729 = vlaneseq
    %v730 = vshrl.u32 %v729, 7
    %v731 = vsub.s32 3, %v730
    %v732 = vrot.slane %v663, %v731
    %v733 = vlaneseq
    %v734 = vshrl.u32 %v733, 7
    %v735 = vsub.s32 7, %v734
    %v736 = vrot.slane %v663, %v735
    %v739 = vlaneseq
    %v740 = vshrl.u32 %v739, 7
    %v741 = vsub.s32 3, %v740
    %v742 = vrot.slane %v732, %v741
    %v743 = vlaneseq
    %v744 = vshrl.u32 %v743, 7
    %v745 = vsub.s32 3, %v744
    %v746 = vrot.slane %v736, %v745
    %v747 = vmul.f32 %v126, %v742
    %v748 = vmul.f32 %v126, %v746
    %v749 = vadd.f32 %v727, %v747
    %v750 = vadd.f32 %v728, %v748
    %v751 = vadd.f32 %v749, %v153
    %v752 = vadd.f32 %v750, %v153
    %v753 = vxor.u32 %v751, 2147483648
    %v754 = vxor.u32 %v752, 2147483648
    %v755 = vmul.f32 %v753, 1.442695
    %v756 = vpow.pop %v755
    %v757 = vmul.f32 %v754, 1.442695
    %v758 = vpow.pop %v757
    %v759 = vadd.f32 %v756, 1.0
    %v760 = vadd.f32 %v758, 1.0
    %v761 = vrcp.pop %v759
    %v762 = vmul.f32 1.0, %v761
    %v763 = vrcp.pop %v760
    %v764 = vmul.f32 1.0, %v763
    %v765 = vmul.f32 %v751, %v762
    %v766 = vmul.f32 %v752, %v764
    %767 = vrot.lane.b32.xlu0 %v765, 127
    %v768 = vpop.permute.xlu0 %767
    %769 = vrot.lane.b32.xlu0 %v766, 127
    %v770 = vpop.permute.xlu0 %769
    %v771 = vsel %vm177, %v768, %v770
    %v772 = vsel %vm177, %v770, %v768
    %v773 = vsel %vm189, %v771, -inf
    %v774 = vsel %vm190, %v772, -inf
    %v775 = vmax.f32 %v765, %v773
    %v776 = vmax.f32 %v766, %v774
    %777 = vrot.lane.b32.xlu0 %v765, 1
    %v778 = vpop.permute.xlu0 %777
    %779 = vrot.lane.b32.xlu0 %v766, 1
    %v780 = vpop.permute.xlu0 %779
    %v781 = vsel %vm199, %v778, %v780
    %v782 = vsel %vm199, %v780, %v778
    %v783 = vsel %vm211, %v782, -inf
    %v784 = vsel %vm212, %v781, -inf
    %v785 = vmax.f32 %v775, %v783
    %v786 = vmax.f32 %v776, %v784
    %787 = vrot.lane.b32.xlu0 %v765, 126
    %v788 = vpop.permute.xlu0 %787
    %789 = vrot.lane.b32.xlu0 %v766, 126
    %v790 = vpop.permute.xlu0 %789
    %v791 = vsel %vm221, %v788, %v790
    %v792 = vsel %vm221, %v790, %v788
    %v793 = vsel %vm233, %v791, -inf
    %v794 = vsel %vm234, %v792, -inf
    %v795 = vmax.f32 %v785, %v793
    %v796 = vmax.f32 %v786, %v794
    %797 = vrot.lane.b32.xlu0 %v765, 2
    %v798 = vpop.permute.xlu0 %797
    %799 = vrot.lane.b32.xlu0 %v766, 2
    %v800 = vpop.permute.xlu0 %799
    %v801 = vsel %vm243, %v798, %v800
    %v802 = vsel %vm243, %v800, %v798
    %v803 = vsel %vm255, %v802, -inf
    %v804 = vsel %vm256, %v801, -inf
    %v805 = vmax.f32 %v795, %v803
    %v806 = vmax.f32 %v796, %v804
    %807 = vrot.lane.b32.xlu0 %v805, 112
    %v808 = vpop.permute.xlu0 %807
    %809 = vrot.lane.b32.xlu0 %v806, 112
    %v810 = vpop.permute.xlu0 %809
    %v811 = vsel %vm265, %v808, %v810
    %v812 = vsel %vm265, %v810, %v808
    %v813 = vsel %vm277, %v811, -inf
    %v814 = vsel %vm278, %v812, -inf
    %v815 = vmax.f32 %v805, %v813
    %v816 = vmax.f32 %v806, %v814
    %817 = vrot.lane.b32.xlu0 %v805, 16
    %v818 = vpop.permute.xlu0 %817
    %819 = vrot.lane.b32.xlu0 %v806, 16
    %v820 = vpop.permute.xlu0 %819
    %v821 = vsel %vm287, %v818, %v820
    %v822 = vsel %vm287, %v820, %v818
    %v823 = vsel %vm299, %v822, -inf
    %v824 = vsel %vm300, %v821, -inf
    %v825 = vmax.f32 %v815, %v823
    %v826 = vmax.f32 %v816, %v824
    %827 = vrot.lane.b32.xlu0 %v805, 96
    %v828 = vpop.permute.xlu0 %827
    %829 = vrot.lane.b32.xlu0 %v806, 96
    %v830 = vpop.permute.xlu0 %829
    %v831 = vsel %vm309, %v828, %v830
    %v832 = vsel %vm309, %v830, %v828
    %v833 = vsel %vm321, %v831, -inf
    %v834 = vsel %vm322, %v832, -inf
    %v835 = vmax.f32 %v825, %v833
    %v836 = vmax.f32 %v826, %v834
    %837 = vrot.lane.b32.xlu0 %v805, 32
    %v838 = vpop.permute.xlu0 %837
    %839 = vrot.lane.b32.xlu0 %v806, 32
    %v840 = vpop.permute.xlu0 %839
    %v841 = vsel %vm331, %v838, %v840
    %v842 = vsel %vm331, %v840, %v838
    %v843 = vsel %vm343, %v842, -inf
    %v844 = vsel %vm344, %v841, -inf
    %v845 = vmax.f32 %v835, %v843
    %v846 = vmax.f32 %v836, %v844
    %847 = vrot.lane.b32.xlu0 %v845, 127
    %v848 = vpop.permute.xlu0 %847
    %849 = vrot.lane.b32.xlu0 %v846, 127
    %v850 = vpop.permute.xlu0 %849
    %v851 = vsel %vm177, %v848, %v850
    %v852 = vsel %vm177, %v850, %v848
    %v853 = vsel %vm189, %v851, -inf
    %v854 = vsel %vm190, %v852, -inf
    %v855 = vmax.f32 %v845, %v853
    %v856 = vmax.f32 %v846, %v854
    %857 = vrot.lane.b32.xlu0 %v845, 1
    %v858 = vpop.permute.xlu0 %857
    %859 = vrot.lane.b32.xlu0 %v846, 1
    %v860 = vpop.permute.xlu0 %859
    %v861 = vsel %vm199, %v858, %v860
    %v862 = vsel %vm199, %v860, %v858
    %v863 = vsel %vm211, %v862, -inf
    %v864 = vsel %vm212, %v861, -inf
    %v865 = vmax.f32 %v855, %v863
    %v866 = vmax.f32 %v856, %v864
    %867 = vrot.lane.b32.xlu0 %v845, 126
    %v868 = vpop.permute.xlu0 %867
    %869 = vrot.lane.b32.xlu0 %v846, 126
    %v870 = vpop.permute.xlu0 %869
    %v871 = vsel %vm221, %v868, %v870
    %v872 = vsel %vm221, %v870, %v868
    %v873 = vsel %vm233, %v871, -inf
    %v874 = vsel %vm234, %v872, -inf
    %v875 = vmax.f32 %v865, %v873
    %v876 = vmax.f32 %v866, %v874
    %877 = vrot.lane.b32.xlu0 %v845, 2
    %v878 = vpop.permute.xlu0 %877
    %879 = vrot.lane.b32.xlu0 %v846, 2
    %v880 = vpop.permute.xlu0 %879
    %v881 = vsel %vm243, %v878, %v880
    %v882 = vsel %vm243, %v880, %v878
    %v883 = vsel %vm255, %v882, -inf
    %v884 = vsel %vm256, %v881, -inf
    %v885 = vmax.f32 %v875, %v883
    %v886 = vmax.f32 %v876, %v884
    %887 = vrot.lane.b32.xlu0 %v885, 112
    %v888 = vpop.permute.xlu0 %887
    %889 = vrot.lane.b32.xlu0 %v886, 112
    %v890 = vpop.permute.xlu0 %889
    %v891 = vsel %vm265, %v888, %v890
    %v892 = vsel %vm265, %v890, %v888
    %v893 = vsel %vm277, %v891, -inf
    %v894 = vsel %vm278, %v892, -inf
    %v895 = vmax.f32 %v885, %v893
    %v896 = vmax.f32 %v886, %v894
    %897 = vrot.lane.b32.xlu0 %v885, 16
    %v898 = vpop.permute.xlu0 %897
    %899 = vrot.lane.b32.xlu0 %v886, 16
    %v900 = vpop.permute.xlu0 %899
    %v901 = vsel %vm287, %v898, %v900
    %v902 = vsel %vm287, %v900, %v898
    %v903 = vsel %vm299, %v902, -inf
    %v904 = vsel %vm300, %v901, -inf
    %v905 = vmax.f32 %v895, %v903
    %v906 = vmax.f32 %v896, %v904
    %907 = vrot.lane.b32.xlu0 %v885, 96
    %v908 = vpop.permute.xlu0 %907
    %909 = vrot.lane.b32.xlu0 %v886, 96
    %v910 = vpop.permute.xlu0 %909
    %v911 = vsel %vm309, %v908, %v910
    %v912 = vsel %vm309, %v910, %v908
    %v913 = vsel %vm321, %v911, -inf
    %v914 = vsel %vm322, %v912, -inf
    %v915 = vmax.f32 %v905, %v913
    %v916 = vmax.f32 %v906, %v914
    %917 = vrot.lane.b32.xlu0 %v885, 32
    %v918 = vpop.permute.xlu0 %917
    %919 = vrot.lane.b32.xlu0 %v886, 32
    %v920 = vpop.permute.xlu0 %919
    %v921 = vsel %vm331, %v918, %v920
    %v922 = vsel %vm331, %v920, %v918
    %v923 = vsel %vm343, %v922, -inf
    %v924 = vsel %vm344, %v921, -inf
    %v925 = vmax.f32 %v915, %v923
    %v926 = vmax.f32 %v916, %v924
    %927 = vrot.lane.b32.xlu0 %v925, 127
    %v928 = vpop.permute.xlu0 %927
    %929 = vrot.lane.b32.xlu0 %v926, 127
    %v930 = vpop.permute.xlu0 %929
    %v931 = vsel %vm177, %v928, %v930
    %v932 = vsel %vm177, %v930, %v928
    %v933 = vsel %vm189, %v931, -inf
    %v934 = vsel %vm190, %v932, -inf
    %v935 = vmax.f32 %v925, %v933
    %v936 = vmax.f32 %v926, %v934
    %937 = vrot.lane.b32.xlu0 %v925, 1
    %v938 = vpop.permute.xlu0 %937
    %939 = vrot.lane.b32.xlu0 %v926, 1
    %v940 = vpop.permute.xlu0 %939
    %v941 = vsel %vm199, %v938, %v940
    %v942 = vsel %vm199, %v940, %v938
    %v943 = vsel %vm211, %v942, -inf
    %v944 = vsel %vm212, %v941, -inf
    %v945 = vmax.f32 %v935, %v943
    %v946 = vmax.f32 %v936, %v944
    %947 = vrot.lane.b32.xlu0 %v925, 126
    %v948 = vpop.permute.xlu0 %947
    %949 = vrot.lane.b32.xlu0 %v926, 126
    %v950 = vpop.permute.xlu0 %949
    %v951 = vsel %vm221, %v948, %v950
    %v952 = vsel %vm221, %v950, %v948
    %v953 = vsel %vm233, %v951, -inf
    %v954 = vsel %vm234, %v952, -inf
    %v955 = vmax.f32 %v945, %v953
    %v956 = vmax.f32 %v946, %v954
    %957 = vrot.lane.b32.xlu0 %v925, 2
    %v958 = vpop.permute.xlu0 %957
    %959 = vrot.lane.b32.xlu0 %v926, 2
    %v960 = vpop.permute.xlu0 %959
    %v961 = vsel %vm243, %v958, %v960
    %v962 = vsel %vm243, %v960, %v958
    %v963 = vsel %vm255, %v962, -inf
    %v964 = vsel %vm256, %v961, -inf
    %v965 = vmax.f32 %v955, %v963
    %v966 = vmax.f32 %v956, %v964
    %967 = vrot.lane.b32.xlu0 %v965, 112
    %v968 = vpop.permute.xlu0 %967
    %969 = vrot.lane.b32.xlu0 %v966, 112
    %v970 = vpop.permute.xlu0 %969
    %v971 = vsel %vm265, %v968, %v970
    %v972 = vsel %vm265, %v970, %v968
    %v973 = vsel %vm277, %v971, -inf
    %v974 = vsel %vm278, %v972, -inf
    %v975 = vmax.f32 %v965, %v973
    %v976 = vmax.f32 %v966, %v974
    %977 = vrot.lane.b32.xlu0 %v965, 16
    %v978 = vpop.permute.xlu0 %977
    %979 = vrot.lane.b32.xlu0 %v966, 16
    %v980 = vpop.permute.xlu0 %979
    %v981 = vsel %vm287, %v978, %v980
    %v982 = vsel %vm287, %v980, %v978
    %v983 = vsel %vm299, %v982, -inf
    %v984 = vsel %vm300, %v981, -inf
    %v985 = vmax.f32 %v975, %v983
    %v986 = vmax.f32 %v976, %v984
    %987 = vrot.lane.b32.xlu0 %v965, 96
    %v988 = vpop.permute.xlu0 %987
    %989 = vrot.lane.b32.xlu0 %v966, 96
    %v990 = vpop.permute.xlu0 %989
    %v991 = vsel %vm309, %v988, %v990
    %v992 = vsel %vm309, %v990, %v988
    %v993 = vsel %vm321, %v991, -inf
    %v994 = vsel %vm322, %v992, -inf
    %v995 = vmax.f32 %v985, %v993
    %v996 = vmax.f32 %v986, %v994
    %997 = vrot.lane.b32.xlu0 %v965, 32
    %v998 = vpop.permute.xlu0 %997
    %999 = vrot.lane.b32.xlu0 %v966, 32
    %v1000 = vpop.permute.xlu0 %999
    %v1001 = vsel %vm331, %v998, %v1000
    %v1002 = vsel %vm331, %v1000, %v998
    %v1003 = vsel %vm343, %v1002, -inf
    %v1004 = vsel %vm344, %v1001, -inf
    %v1005 = vmax.f32 %v995, %v1003
    %v1006 = vmax.f32 %v996, %v1004
    %v1007 = vlaneseq
    %v1008 = vshrl.u32 %v1007, 7
    %v1009 = vsub.s32 0, %v1008
    %v1010 = vrot.slane %v765, %v1009
    %v1011 = vlaneseq
    %v1012 = vshrl.u32 %v1011, 7
    %v1013 = vsub.s32 0, %v1012
    %v1014 = vrot.slane %v766, %v1013
    %v1015 = vmul.f32 %v512, %v1010
    %v1016 = vmul.f32 %v512, %v1014
    %v1017 = vlaneseq
    %v1018 = vshrl.u32 %v1017, 7
    %v1019 = vsub.s32 1, %v1018
    %v1020 = vrot.slane %v765, %v1019
    %v1021 = vlaneseq
    %v1022 = vshrl.u32 %v1021, 7
    %v1023 = vsub.s32 1, %v1022
    %v1024 = vrot.slane %v766, %v1023
    %v1025 = vmul.f32 %v526, %v1020
    %v1026 = vmul.f32 %v526, %v1024
    %v1027 = vadd.f32 %v1015, %v1025
    %v1028 = vadd.f32 %v1016, %v1026
    %v1029 = vlaneseq
    %v1030 = vshrl.u32 %v1029, 7
    %v1031 = vsub.s32 0, %v1030
    %v1032 = vrot.slane %v845, %v1031
    %v1033 = vlaneseq
    %v1034 = vshrl.u32 %v1033, 7
    %v1035 = vsub.s32 0, %v1034
    %v1036 = vrot.slane %v846, %v1035
    %v1037 = vmul.f32 %v543, %v1032
    %v1038 = vmul.f32 %v543, %v1036
    %v1039 = vlaneseq
    %v1040 = vshrl.u32 %v1039, 7
    %v1041 = vsub.s32 1, %v1040
    %v1042 = vrot.slane %v845, %v1041
    %v1043 = vlaneseq
    %v1044 = vshrl.u32 %v1043, 7
    %v1045 = vsub.s32 1, %v1044
    %v1046 = vrot.slane %v846, %v1045
    %v1047 = vmul.f32 %v557, %v1042
    %v1048 = vmul.f32 %v557, %v1046
    %v1049 = vadd.f32 %v1037, %v1047
    %v1050 = vadd.f32 %v1038, %v1048
    %v1051 = vadd.f32 %v1027, %v1049
    %v1052 = vadd.f32 %v1028, %v1050
    %v1053 = vlaneseq
    %v1054 = vshrl.u32 %v1053, 7
    %v1055 = vsub.s32 0, %v1054
    %v1056 = vrot.slane %v925, %v1055
    %v1057 = vlaneseq
    %v1058 = vshrl.u32 %v1057, 7
    %v1059 = vsub.s32 0, %v1058
    %v1060 = vrot.slane %v926, %v1059
    %v1061 = vmul.f32 %v576, %v1056
    %v1062 = vmul.f32 %v576, %v1060
    %v1063 = vlaneseq
    %v1064 = vshrl.u32 %v1063, 7
    %v1065 = vsub.s32 1, %v1064
    %v1066 = vrot.slane %v925, %v1065
    %v1067 = vlaneseq
    %v1068 = vshrl.u32 %v1067, 7
    %v1069 = vsub.s32 1, %v1068
    %v1070 = vrot.slane %v926, %v1069
    %v1071 = vmul.f32 %v590, %v1066
    %v1072 = vmul.f32 %v590, %v1070
    %v1073 = vadd.f32 %v1061, %v1071
    %v1074 = vadd.f32 %v1062, %v1072
    %v1075 = vadd.f32 %v1051, %v1073
    %v1076 = vadd.f32 %v1052, %v1074
    %v1077 = vlaneseq
    %v1078 = vshrl.u32 %v1077, 7
    %v1079 = vsub.s32 0, %v1078
    %v1080 = vrot.slane %v1005, %v1079
    %v1081 = vlaneseq
    %v1082 = vshrl.u32 %v1081, 7
    %v1083 = vsub.s32 0, %v1082
    %v1084 = vrot.slane %v1006, %v1083
    %v1085 = vmul.f32 %v609, %v1080
    %v1086 = vmul.f32 %v609, %v1084
    %v1087 = vlaneseq
    %v1088 = vshrl.u32 %v1087, 7
    %v1089 = vsub.s32 1, %v1088
    %v1090 = vrot.slane %v1005, %v1089
    %v1091 = vlaneseq
    %v1092 = vshrl.u32 %v1091, 7
    %v1093 = vsub.s32 1, %v1092
    %v1094 = vrot.slane %v1006, %v1093
    %v1095 = vmul.f32 %v623, %v1090
    %v1096 = vmul.f32 %v623, %v1094
    %v1097 = vadd.f32 %v1085, %v1095
    %v1098 = vadd.f32 %v1086, %v1096
    %v1099 = vadd.f32 %v1075, %v1097
    %v1100 = vadd.f32 %v1076, %v1098
    %v1101 = vadd.f32 %v1099, %v642
    %v1102 = vadd.f32 %v1100, %v642
    %v1103 = vxor.u32 %v1101, 2147483648
    %v1104 = vxor.u32 %v1102, 2147483648
    %v1105 = vmul.f32 %v1103, 1.442695
    %v1106 = vpow.pop %v1105
    %v1107 = vmul.f32 %v1104, 1.442695
    %v1108 = vpow.pop %v1107
    %v1109 = vadd.f32 %v1106, 1.0
    %v1110 = vadd.f32 %v1108, 1.0
    %v1111 = vrcp.pop %v1109
    %v1112 = vmul.f32 1.0, %v1111
    %v1113 = vrcp.pop %v1110
    %v1114 = vmul.f32 1.0, %v1113
    %v1115 = vmul.f32 %v1101, %v1112
    %v1116 = vmul.f32 %v1102, %v1114
    %s1117 = scalar_lea.vmem [#allocation2], 16
    %1118 = vst [vmem:[%s1117] sm:$0xff] %v1115
    %1119 = vst [vmem:[%s1117 + $0x8] sm:$0xff] %v1116
    // Predicated region
    $region26: #{tpu_custom_call.1} parent=1 // pred_check
      _
    $region27: #{tpu_custom_call.1} parent=1 // pred_check_branch
      %1121 = sbr.rel (0) target = $region29
    $region28: #{tpu_custom_call.1} parent=1 // pred_region
      %s1123 = ssub.s32 512, 512
      %1124 = vsyncadd [#allocation3], %s1123
      %s1125 = sshll.u32 [#allocation2], 4
      %s1126 = int_to_ptr.vmem [resolvable:$true] %s1125
      %1131 = dma.vmem_to_hbm [thread:$0]  %s1126, 512, %s6, [#allocation3], 256, 256, 16
    $region29: #{tpu_custom_call.1} parent=1 // pred_fallthru
      _
    // Predicated region
    $region30: #{tpu_custom_call.1} parent=1 // pred_check
      _
    $region31: #{tpu_custom_call.1} parent=1 // pred_check_branch
      %1133 = sbr.rel (0) target = $region33
    $region32: #{tpu_custom_call.1} parent=1 // pred_region
      %1134 = dma.done [#allocation3], 512
    $region33: #{tpu_custom_call.1} parent=1 // pred_fallthru
      _
    %1135 = vsyncpa [#allocation3], 1

</llo_original>
